<compile_context>
chip_gen: v7x
topology: tpu7x:2x2x1
jax: 0.10.0
libtpu: 0.0.40
codegen_flags: <defaults>
</compile_context>

<pallas_src>
import functools

import jax
import jax.numpy as jnp
from jax.experimental import pallas as pl
from jax.experimental.pallas import tpu as pltpu

HIDDEN = 500
DROP_P = 0.15
LANE = 128
SUBLANE = 16                      # bf16 sublane tile (also covers f32's 8)

_KEEP = 1.0 - DROP_P
# threshold on the low 31 bits of the hash so P(keep) == _KEEP
_KEEP_THRESH_31 = int(_KEEP * 2147483648.0)


def _round_up(x, m):
    return (x + m - 1) // m * m


def _keep_mask(shape, salt):
    """Bernoulli(keep) mask from a stateless int32 hash (portable: no TPU PRNG
    primitives, so it lowers on Mosaic and in interpret mode alike)."""
    r = jax.lax.broadcasted_iota(jnp.int32, shape, 0)
    c = jax.lax.broadcasted_iota(jnp.int32, shape, 1)
    x = ((r << 10) ^ c) ^ salt                    # unique element id (+ salt)
    # two xorshift-style mixing rounds (logical right shifts)
    x = x ^ (x << 13)
    x = x ^ jax.lax.shift_right_logical(x, jnp.int32(17))
    x = x ^ (x << 5)
    x = x + jnp.int32(0x3C6EF35F)
    x = x ^ (x << 13)
    x = x ^ jax.lax.shift_right_logical(x, jnp.int32(17))
    x = x ^ (x << 5)
    x = jnp.bitwise_and(x, jnp.int32(0x7FFFFFFF))
    return x < jnp.int32(_KEEP_THRESH_31)


def vae_kernel(seed_ref,                                  # scalar prefetch (SMEM)
               x_ref, eps_ref,
               w1e_ref, b1e_ref, wms_ref, bms_ref,
               w1d_ref, b1d_ref, w2d_ref, b2d_ref,
               recon_ref, kl_ref,
               *, latent_dims, latent_pad):
    # independent, deterministic dropout salts per batch block / layer
    salt_enc = seed_ref[0] ^ (pl.program_id(0) * jnp.int32(0x01000193))
    salt_dec = salt_enc + jnp.int32(0x5BD1E995)

    x = x_ref[...]                                        # (bB, D_pad) bf16

    # ---------------- encoder ----------------
    h = jnp.dot(x, w1e_ref[...], preferred_element_type=jnp.float32) + b1e_ref[...]
    h = jnp.maximum(h, 0.0)                               # ReLU
    # inverted dropout: the 1/keep scale is folded into wms at pack time
    h = jnp.where(_keep_mask(h.shape, salt_enc), h, 0.0)

    # fused mu | log-sigma head: one lane-aligned (512, 2*latent_pad) matmul
    ms = jnp.dot(h.astype(jnp.bfloat16), wms_ref[...],
                 preferred_element_type=jnp.float32) + bms_ref[...]
    mu = ms[:, :latent_pad]
    pre = ms[:, latent_pad:]                              # == log(sigma)
    sigma = jnp.exp(pre)
    z = mu + sigma * eps_ref[...].astype(jnp.float32)     # reparameterization

    # KL = sigma^2 + mu^2 - log(sigma) - 1/2, with log(sigma) == pre.
    # Padded latent lanes have mu=0, pre=0, sigma=1 (padded wms/bms cols are
    # exactly zero) so each contributes exactly 0.5 -> constant correction.
    kl_t = sigma * sigma + mu * mu - pre - 0.5
    kl_ref[...] = (jnp.sum(kl_t, axis=1, keepdims=True)
                   - jnp.float32(0.5 * (latent_pad - latent_dims)))

    # ---------------- decoder ----------------
    hd = jnp.dot(z.astype(jnp.bfloat16), w1d_ref[...],
                 preferred_element_type=jnp.float32) + b1d_ref[...]
    hd = jnp.maximum(hd, 0.0)
    # inverted dropout: the 1/keep scale is folded into w2d at pack time
    hd = jnp.where(_keep_mask(hd.shape, salt_dec), hd, 0.0)

    logits = jnp.dot(hd.astype(jnp.bfloat16), w2d_ref[...],
                     preferred_element_type=jnp.float32) + b2d_ref[...]
    # sigmoid(x) == 0.5 * (1 + tanh(x/2)) -> tanh runs on the EUP, no VPU divide
    recon_ref[...] = (0.5 * (jnp.tanh(0.5 * logits) + 1.0)).astype(recon_ref.dtype)


def pack_params(params, *, latent_dims):
    """Pad to lane-aligned shapes, fuse the mu|log-sigma heads, fold the 1/keep
    dropout scale into the layer following each dropout, cast weights to bf16.
    Call ONCE per parameter update, not per forward."""
    D = params["w1e"].shape[0]
    D_pad = _round_up(D, LANE)
    H_pad = _round_up(HIDDEN, LANE)                       # 512
    L_pad = _round_up(latent_dims, LANE)                  # 128
    inv_keep = 1.0 / _KEEP

    def pad(w, rows, cols, scale=1.0):
        out = jnp.zeros((rows, cols), jnp.float32)
        return out.at[:w.shape[0], :w.shape[1]].set(w.astype(jnp.float32) * scale)

    w1e = pad(params["w1e"], D_pad, H_pad).astype(jnp.bfloat16)
    b1e = pad(params["b1e"], 1, H_pad)

    wms = jnp.zeros((H_pad, 2 * L_pad), jnp.float32)
    wms = wms.at[:HIDDEN, :latent_dims].set(params["w2e"].astype(jnp.float32) * inv_keep)
    wms = wms.at[:HIDDEN, L_pad:L_pad + latent_dims].set(
        params["w3e"].astype(jnp.float32) * inv_keep)
    wms = wms.astype(jnp.bfloat16)
    bms = jnp.zeros((1, 2 * L_pad), jnp.float32)
    bms = bms.at[:, :latent_dims].set(params["b2e"].astype(jnp.float32))
    bms = bms.at[:, L_pad:L_pad + latent_dims].set(params["b3e"].astype(jnp.float32))

    w1d = pad(params["w1d"], L_pad, H_pad).astype(jnp.bfloat16)
    b1d = pad(params["b1d"], 1, H_pad)
    w2d = pad(params["w2d"], H_pad, D_pad, scale=inv_keep).astype(jnp.bfloat16)
    b2d = pad(params["b2d"], 1, D_pad)
    return (w1e, b1e, wms, bms, w1d, b1d, w2d, b2d)


def _block_rows(B):
    """Batch tile: >= 2 grid steps whenever B allows (v7x megacore), <= 512 rows."""
    half = -(-B // 2)                                     # cdiv(B, 2)
    return min(512, max(SUBLANE, _round_up(half, SUBLANE)))


def vae_forward(x4d, packed, eps, seed, *, latent_dims):
    (w1e, b1e, wms, bms, w1d, b1d, w2d, b2d) = packed

    B = x4d.shape[0]
    x = x4d.reshape(B, -1)                                # torch.flatten(x, 1)
    D = x.shape[1]
    D_pad, H_pad = w1e.shape
    L_pad = w1d.shape[0]
    assert D_pad == _round_up(D, LANE), "packed params do not match input width"

    block_b = _block_rows(B)
    B_pad = _round_up(B, block_b)
    n_blocks = B_pad // block_b

    xp = jnp.zeros((B_pad, D_pad), jnp.bfloat16).at[:B, :D].set(x.astype(jnp.bfloat16))
    epsp = jnp.zeros((B_pad, L_pad), jnp.bfloat16).at[:B, :latent_dims].set(
        eps.astype(jnp.bfloat16))

    kernel = functools.partial(vae_kernel, latent_dims=latent_dims, latent_pad=L_pad)

    def _const(shape):
        # grid-invariant block: single-buffer it (no point double-buffering)
        return pl.BlockSpec(shape, lambda i, s: (0, 0), pipeline_mode=pl.Buffered(1))

    grid_spec = pltpu.PrefetchScalarGridSpec(
        num_scalar_prefetch=1,
        grid=(n_blocks,),
        in_specs=[
            pl.BlockSpec((block_b, D_pad), lambda i, s: (i, 0)),      # x
            pl.BlockSpec((block_b, L_pad), lambda i, s: (i, 0)),      # eps
            _const((D_pad, H_pad)),                                   # w1e
            _const((1, H_pad)),                                       # b1e
            _const((H_pad, 2 * L_pad)),                               # w_mu|logsig
            _const((1, 2 * L_pad)),                                   # b_mu|logsig
            _const((L_pad, H_pad)),                                   # w1d
            _const((1, H_pad)),                                       # b1d
            _const((H_pad, D_pad)),                                   # w2d
            _const((1, D_pad)),                                       # b2d
        ],
        out_specs=(
            pl.BlockSpec((block_b, D_pad), lambda i, s: (i, 0)),      # recon (bf16)
            pl.BlockSpec((block_b, 1), lambda i, s: (i, 0)),          # per-row KL
        ),
    )

    recon_p, kl_p = pl.pallas_call(
        kernel,
        grid_spec=grid_spec,
        out_shape=(jax.ShapeDtypeStruct((B_pad, D_pad), jnp.bfloat16),
                   jax.ShapeDtypeStruct((B_pad, 1), jnp.float32)),
        compiler_params=pltpu.CompilerParams(
            dimension_semantics=("parallel",),
            vmem_limit_bytes=48 * 1024 * 1024),
    )(seed, xp, epsp, w1e, b1e, wms, bms, w1d, b1d, w2d, b2d)

    recon = recon_p[:B, :D]                               # bf16 reconstruction
    kl = jnp.sum(kl_p[:B, 0])
    return recon, kl


def init_params(key, latent_dims, input_shape):
    """Unpadded params, weights stored (in, out) = transposed nn.Linear layout."""
    ks = jax.random.split(key, 10)
    scale = 0.02

    def lin(kw, kb, fan_in, fan_out):
        w = scale * jax.random.normal(kw, (fan_in, fan_out), dtype=jnp.float32)
        b = scale * jax.random.normal(kb, (1, fan_out), dtype=jnp.float32)
        return w, b

    w1e, b1e = lin(ks[0], ks[1], input_shape, HIDDEN)
    w2e, b2e = lin(ks[2], ks[3], HIDDEN, latent_dims)
    w3e, b3e = lin(ks[4], ks[5], HIDDEN, latent_dims)
    w1d, b1d = lin(ks[6], ks[7], latent_dims, HIDDEN)
    w2d, b2d = lin(ks[8], ks[9], HIDDEN, input_shape)
    return dict(w1e=w1e, b1e=b1e, w2e=w2e, b2e=b2e, w3e=w3e, b3e=b3e,
                w1d=w1d, b1d=b1d, w2d=w2d, b2d=b2d)


if __name__ == "__main__":
    B, C, H, W = 2, 4, 8, 8
    input_shape = C * H * W        # 256
    latent_dims = 16

    root = jax.random.PRNGKey(0)
    k_x, k_par, k_eps = jax.random.split(root, 3)

    x = jax.random.normal(k_x, (B, C, H, W), dtype=jnp.float32)
    params = init_params(k_par, latent_dims, input_shape)
    packed = pack_params(params, latent_dims=latent_dims)   # pack ONCE, reuse per call
    # reparameterization noise ~ N(0, 1)
    eps = jax.random.normal(k_eps, (B, latent_dims), dtype=jnp.float32)
    # seed for the in-kernel dropout hash
    seed = jnp.array([42], dtype=jnp.int32)

    fwd = jax.jit(vae_forward, static_argnames=("latent_dims",))
    recon, kl = fwd(x, packed, eps, seed, latent_dims=latent_dims)
    jax.block_until_ready((recon, kl))

    assert recon.shape == (B, input_shape)
    assert kl.shape == ()
    assert bool(jnp.all(jnp.isfinite(recon.astype(jnp.float32))))
    assert bool(jnp.isfinite(kl))
    print("KERNEL_OK")
</pallas_src>

<mosaic_0001>
module attributes {stable_mosaic.version = 11 : i64} {
  func.func @vae_kernel(%arg0: i32, %arg1: memref<1xi32, #tpu.memory_space<smem>>, %arg2: memref<16x256xbf16, #tpu.memory_space<vmem>>, %arg3: memref<16x128xbf16, #tpu.memory_space<vmem>>, %arg4: memref<256x512xbf16, #tpu.memory_space<vmem>>, %arg5: memref<1x512xf32, #tpu.memory_space<vmem>>, %arg6: memref<512x256xbf16, #tpu.memory_space<vmem>>, %arg7: memref<1x256xf32, #tpu.memory_space<vmem>>, %arg8: memref<128x512xbf16, #tpu.memory_space<vmem>>, %arg9: memref<1x512xf32, #tpu.memory_space<vmem>>, %arg10: memref<512x256xbf16, #tpu.memory_space<vmem>>, %arg11: memref<1x256xf32, #tpu.memory_space<vmem>>, %arg12: memref<16x256xbf16, #tpu.memory_space<vmem>>, %arg13: memref<16x1xf32, #tpu.memory_space<vmem>>) attributes {dimension_semantics = [#tpu.dimension_semantics<parallel>], iteration_bounds = array<i64: 1>, scalar_prefetch = 1 : i64, scratch_operands = 0 : i64, tpu.core_type = #tpu.core_type<tc>, window_params = [{transform_indices = @transform_0, window_bounds = array<i64: 16, 256>}, {transform_indices = @transform_1, window_bounds = array<i64: 16, 128>}, {pipeline_mode = #tpu.pipeline_mode<synchronous>, transform_indices = @transform_2, window_bounds = array<i64: 256, 512>}, {pipeline_mode = #tpu.pipeline_mode<synchronous>, transform_indices = @transform_3, window_bounds = array<i64: 1, 512>}, {pipeline_mode = #tpu.pipeline_mode<synchronous>, transform_indices = @transform_4, window_bounds = array<i64: 512, 256>}, {pipeline_mode = #tpu.pipeline_mode<synchronous>, transform_indices = @transform_5, window_bounds = array<i64: 1, 256>}, {pipeline_mode = #tpu.pipeline_mode<synchronous>, transform_indices = @transform_6, window_bounds = array<i64: 128, 512>}, {pipeline_mode = #tpu.pipeline_mode<synchronous>, transform_indices = @transform_7, window_bounds = array<i64: 1, 512>}, {pipeline_mode = #tpu.pipeline_mode<synchronous>, transform_indices = @transform_8, window_bounds = array<i64: 512, 256>}, {pipeline_mode = #tpu.pipeline_mode<synchronous>, transform_indices = @transform_9, window_bounds = array<i64: 1, 256>}, {transform_indices = @transform_10, window_bounds = array<i64: 16, 256>}, {transform_indices = @transform_11, window_bounds = array<i64: 16, 1>}]} {
    %c0 = arith.constant 0 : index
    %0 = memref.load %arg1[%c0] : memref<1xi32, #tpu.memory_space<smem>>
    %c16777619_i32 = arith.constant 16777619 : i32
    %1 = arith.muli %arg0, %c16777619_i32 : i32
    %2 = arith.xori %0, %1 : i32
    %c1540483477_i32 = arith.constant 1540483477 : i32
    %3 = arith.addi %2, %c1540483477_i32 : i32
    %c0_0 = arith.constant 0 : index
    %c0_1 = arith.constant 0 : index
    %4 = vector.load %arg2[%c0_0, %c0_1] : memref<16x256xbf16, #tpu.memory_space<vmem>>, vector<16x256xbf16>
    %c0_2 = arith.constant 0 : index
    %c0_3 = arith.constant 0 : index
    %5 = vector.load %arg4[%c0_2, %c0_3] : memref<256x512xbf16, #tpu.memory_space<vmem>>, vector<256x512xbf16>
    %cst = arith.constant dense<0.000000e+00> : vector<16x512xf32>
    %6 = tpu.matmul %4, %5, %cst {dimension_numbers = #tpu.dot_dimension_numbers<[1], [0], [0], [1], [0, 0, 1, 1], [], []>} : vector<16x256xbf16>, vector<256x512xbf16>, vector<16x512xf32> -> vector<16x512xf32>
    %c0_4 = arith.constant 0 : index
    %c0_5 = arith.constant 0 : index
    %7 = vector.load %arg5[%c0_4, %c0_5] : memref<1x512xf32, #tpu.memory_space<vmem>>, vector<1x512xf32>
    %8 = vector.broadcast %7 : vector<1x512xf32> to vector<16x512xf32>
    %9 = arith.addf %6, %8 : vector<16x512xf32>
    %cst_6 = arith.constant 0.000000e+00 : f32
    %10 = vector.broadcast %cst_6 : f32 to vector<16x512xf32>
    %11 = arith.maximumf %9, %10 : vector<16x512xf32>
    %12 = tpu.iota {dimensions = array<i32: 0>} : vector<16x512xi32>
    %13 = tpu.iota {dimensions = array<i32: 1>} : vector<16x512xi32>
    %c10_i32 = arith.constant 10 : i32
    %14 = vector.broadcast %c10_i32 : i32 to vector<16x512xi32>
    %15 = arith.shli %12, %14 : vector<16x512xi32>
    %16 = arith.xori %15, %13 : vector<16x512xi32>
    %17 = vector.broadcast %2 : i32 to vector<16x512xi32>
    %18 = arith.xori %16, %17 : vector<16x512xi32>
    %c13_i32 = arith.constant 13 : i32
    %19 = vector.broadcast %c13_i32 : i32 to vector<16x512xi32>
    %20 = arith.shli %18, %19 : vector<16x512xi32>
    %21 = arith.xori %18, %20 : vector<16x512xi32>
    %c17_i32 = arith.constant 17 : i32
    %22 = vector.broadcast %c17_i32 : i32 to vector<16x512xi32>
    %23 = arith.shrui %21, %22 : vector<16x512xi32>
    %24 = arith.xori %21, %23 : vector<16x512xi32>
    %c5_i32 = arith.constant 5 : i32
    %25 = vector.broadcast %c5_i32 : i32 to vector<16x512xi32>
    %26 = arith.shli %24, %25 : vector<16x512xi32>
    %27 = arith.xori %24, %26 : vector<16x512xi32>
    %c1013904223_i32 = arith.constant 1013904223 : i32
    %28 = vector.broadcast %c1013904223_i32 : i32 to vector<16x512xi32>
    %29 = arith.addi %27, %28 : vector<16x512xi32>
    %c13_i32_7 = arith.constant 13 : i32
    %30 = vector.broadcast %c13_i32_7 : i32 to vector<16x512xi32>
    %31 = arith.shli %29, %30 : vector<16x512xi32>
    %32 = arith.xori %29, %31 : vector<16x512xi32>
    %c17_i32_8 = arith.constant 17 : i32
    %33 = vector.broadcast %c17_i32_8 : i32 to vector<16x512xi32>
    %34 = arith.shrui %32, %33 : vector<16x512xi32>
    %35 = arith.xori %32, %34 : vector<16x512xi32>
    %c5_i32_9 = arith.constant 5 : i32
    %36 = vector.broadcast %c5_i32_9 : i32 to vector<16x512xi32>
    %37 = arith.shli %35, %36 : vector<16x512xi32>
    %38 = arith.xori %35, %37 : vector<16x512xi32>
    %c2147483647_i32 = arith.constant 2147483647 : i32
    %39 = vector.broadcast %c2147483647_i32 : i32 to vector<16x512xi32>
    %40 = arith.andi %38, %39 : vector<16x512xi32>
    %c1825361100_i32 = arith.constant 1825361100 : i32
    %41 = vector.broadcast %c1825361100_i32 : i32 to vector<16x512xi32>
    %42 = arith.cmpi slt, %40, %41 : vector<16x512xi32>
    %cst_10 = arith.constant 0.000000e+00 : f32
    %43 = vector.broadcast %cst_10 : f32 to vector<16x512xf32>
    %44 = arith.select %42, %11, %43 : vector<16x512xi1>, vector<16x512xf32>
    %45 = arith.truncf %44 : vector<16x512xf32> to vector<16x512xbf16>
    %c0_11 = arith.constant 0 : index
    %c0_12 = arith.constant 0 : index
    %46 = vector.load %arg6[%c0_11, %c0_12] : memref<512x256xbf16, #tpu.memory_space<vmem>>, vector<512x256xbf16>
    %cst_13 = arith.constant dense<0.000000e+00> : vector<16x256xf32>
    %47 = tpu.matmul %45, %46, %cst_13 {dimension_numbers = #tpu.dot_dimension_numbers<[1], [0], [0], [1], [0, 0, 1, 1], [], []>} : vector<16x512xbf16>, vector<512x256xbf16>, vector<16x256xf32> -> vector<16x256xf32>
    %c0_14 = arith.constant 0 : index
    %c0_15 = arith.constant 0 : index
    %48 = vector.load %arg7[%c0_14, %c0_15] : memref<1x256xf32, #tpu.memory_space<vmem>>, vector<1x256xf32>
    %49 = vector.broadcast %48 : vector<1x256xf32> to vector<16x256xf32>
    %50 = arith.addf %47, %49 : vector<16x256xf32>
    %51 = vector.extract_strided_slice %50 {offsets = [0, 0], sizes = [16, 128], strides = [1, 1]} : vector<16x256xf32> to vector<16x128xf32>
    %52 = vector.extract_strided_slice %50 {offsets = [0, 128], sizes = [16, 128], strides = [1, 1]} : vector<16x256xf32> to vector<16x128xf32>
    %53 = math.exp %52 : vector<16x128xf32>
    %c0_16 = arith.constant 0 : index
    %c0_17 = arith.constant 0 : index
    %54 = vector.load %arg3[%c0_16, %c0_17] : memref<16x128xbf16, #tpu.memory_space<vmem>>, vector<16x128xbf16>
    %55 = arith.extf %54 : vector<16x128xbf16> to vector<16x128xf32>
    %56 = arith.mulf %53, %55 : vector<16x128xf32>
    %57 = arith.addf %51, %56 : vector<16x128xf32>
    %58 = arith.mulf %53, %53 : vector<16x128xf32>
    %59 = arith.mulf %51, %51 : vector<16x128xf32>
    %60 = arith.addf %58, %59 : vector<16x128xf32>
    %61 = arith.subf %60, %52 : vector<16x128xf32>
    %cst_18 = arith.constant 5.000000e-01 : f32
    %62 = vector.broadcast %cst_18 : f32 to vector<16x128xf32>
    %63 = arith.subf %61, %62 : vector<16x128xf32>
    %cst_19 = arith.constant dense<0.000000e+00> : vector<16xf32>
    %64 = vector.multi_reduction <add>, %63, %cst_19 [1] : vector<16x128xf32> to vector<16xf32>
    %65 = vector.shape_cast %64 : vector<16xf32> to vector<16x1xf32>
    %cst_20 = arith.constant 5.600000e+01 : f32
    %66 = vector.broadcast %cst_20 : f32 to vector<16x1xf32>
    %67 = arith.subf %65, %66 : vector<16x1xf32>
    %c0_21 = arith.constant 0 : index
    %c0_22 = arith.constant 0 : index
    %68 = vector.load %arg13[%c0_21, %c0_22] : memref<16x1xf32, #tpu.memory_space<vmem>>, vector<16x1xf32>
    tpu.vector_store %arg13[%c0_21, %c0_22], %67 {strides = array<i32>} : memref<16x1xf32, #tpu.memory_space<vmem>>, vector<16x1xf32>,
    %69 = arith.truncf %57 : vector<16x128xf32> to vector<16x128xbf16>
    %c0_23 = arith.constant 0 : index
    %c0_24 = arith.constant 0 : index
    %70 = vector.load %arg8[%c0_23, %c0_24] : memref<128x512xbf16, #tpu.memory_space<vmem>>, vector<128x512xbf16>
    %cst_25 = arith.constant dense<0.000000e+00> : vector<16x512xf32>
    %71 = tpu.matmul %69, %70, %cst_25 {dimension_numbers = #tpu.dot_dimension_numbers<[1], [0], [0], [1], [0, 0, 1, 1], [], []>} : vector<16x128xbf16>, vector<128x512xbf16>, vector<16x512xf32> -> vector<16x512xf32>
    %c0_26 = arith.constant 0 : index
    %c0_27 = arith.constant 0 : index
    %72 = vector.load %arg9[%c0_26, %c0_27] : memref<1x512xf32, #tpu.memory_space<vmem>>, vector<1x512xf32>
    %73 = vector.broadcast %72 : vector<1x512xf32> to vector<16x512xf32>
    %74 = arith.addf %71, %73 : vector<16x512xf32>
    %cst_28 = arith.constant 0.000000e+00 : f32
    %75 = vector.broadcast %cst_28 : f32 to vector<16x512xf32>
    %76 = arith.maximumf %74, %75 : vector<16x512xf32>
    %77 = tpu.iota {dimensions = array<i32: 0>} : vector<16x512xi32>
    %78 = tpu.iota {dimensions = array<i32: 1>} : vector<16x512xi32>
    %c10_i32_29 = arith.constant 10 : i32
    %79 = vector.broadcast %c10_i32_29 : i32 to vector<16x512xi32>
    %80 = arith.shli %77, %79 : vector<16x512xi32>
    %81 = arith.xori %80, %78 : vector<16x512xi32>
    %82 = vector.broadcast %3 : i32 to vector<16x512xi32>
    %83 = arith.xori %81, %82 : vector<16x512xi32>
    %c13_i32_30 = arith.constant 13 : i32
    %84 = vector.broadcast %c13_i32_30 : i32 to vector<16x512xi32>
    %85 = arith.shli %83, %84 : vector<16x512xi32>
    %86 = arith.xori %83, %85 : vector<16x512xi32>
    %c17_i32_31 = arith.constant 17 : i32
    %87 = vector.broadcast %c17_i32_31 : i32 to vector<16x512xi32>
    %88 = arith.shrui %86, %87 : vector<16x512xi32>
    %89 = arith.xori %86, %88 : vector<16x512xi32>
    %c5_i32_32 = arith.constant 5 : i32
    %90 = vector.broadcast %c5_i32_32 : i32 to vector<16x512xi32>
    %91 = arith.shli %89, %90 : vector<16x512xi32>
    %92 = arith.xori %89, %91 : vector<16x512xi32>
    %c1013904223_i32_33 = arith.constant 1013904223 : i32
    %93 = vector.broadcast %c1013904223_i32_33 : i32 to vector<16x512xi32>
    %94 = arith.addi %92, %93 : vector<16x512xi32>
    %c13_i32_34 = arith.constant 13 : i32
    %95 = vector.broadcast %c13_i32_34 : i32 to vector<16x512xi32>
    %96 = arith.shli %94, %95 : vector<16x512xi32>
    %97 = arith.xori %94, %96 : vector<16x512xi32>
    %c17_i32_35 = arith.constant 17 : i32
    %98 = vector.broadcast %c17_i32_35 : i32 to vector<16x512xi32>
    %99 = arith.shrui %97, %98 : vector<16x512xi32>
    %100 = arith.xori %97, %99 : vector<16x512xi32>
    %c5_i32_36 = arith.constant 5 : i32
    %101 = vector.broadcast %c5_i32_36 : i32 to vector<16x512xi32>
    %102 = arith.shli %100, %101 : vector<16x512xi32>
    %103 = arith.xori %100, %102 : vector<16x512xi32>
    %c2147483647_i32_37 = arith.constant 2147483647 : i32
    %104 = vector.broadcast %c2147483647_i32_37 : i32 to vector<16x512xi32>
    %105 = arith.andi %103, %104 : vector<16x512xi32>
    %c1825361100_i32_38 = arith.constant 1825361100 : i32
    %106 = vector.broadcast %c1825361100_i32_38 : i32 to vector<16x512xi32>
    %107 = arith.cmpi slt, %105, %106 : vector<16x512xi32>
    %cst_39 = arith.constant 0.000000e+00 : f32
    %108 = vector.broadcast %cst_39 : f32 to vector<16x512xf32>
    %109 = arith.select %107, %76, %108 : vector<16x512xi1>, vector<16x512xf32>
    %110 = arith.truncf %109 : vector<16x512xf32> to vector<16x512xbf16>
    %c0_40 = arith.constant 0 : index
    %c0_41 = arith.constant 0 : index
    %111 = vector.load %arg10[%c0_40, %c0_41] : memref<512x256xbf16, #tpu.memory_space<vmem>>, vector<512x256xbf16>
    %cst_42 = arith.constant dense<0.000000e+00> : vector<16x256xf32>
    %112 = tpu.matmul %110, %111, %cst_42 {dimension_numbers = #tpu.dot_dimension_numbers<[1], [0], [0], [1], [0, 0, 1, 1], [], []>} : vector<16x512xbf16>, vector<512x256xbf16>, vector<16x256xf32> -> vector<16x256xf32>
    %c0_43 = arith.constant 0 : index
    %c0_44 = arith.constant 0 : index
    %113 = vector.load %arg11[%c0_43, %c0_44] : memref<1x256xf32, #tpu.memory_space<vmem>>, vector<1x256xf32>
    %114 = vector.broadcast %113 : vector<1x256xf32> to vector<16x256xf32>
    %115 = arith.addf %112, %114 : vector<16x256xf32>
    %cst_45 = arith.constant 5.000000e-01 : f32
    %116 = vector.broadcast %cst_45 : f32 to vector<16x256xf32>
    %117 = arith.mulf %116, %115 : vector<16x256xf32>
    %118 = math.tanh %117 : vector<16x256xf32>
    %cst_46 = arith.constant 1.000000e+00 : f32
    %119 = vector.broadcast %cst_46 : f32 to vector<16x256xf32>
    %120 = arith.addf %118, %119 : vector<16x256xf32>
    %cst_47 = arith.constant 5.000000e-01 : f32
    %121 = vector.broadcast %cst_47 : f32 to vector<16x256xf32>
    %122 = arith.mulf %121, %120 : vector<16x256xf32>
    %123 = arith.truncf %122 : vector<16x256xf32> to vector<16x256xbf16>
    %c0_48 = arith.constant 0 : index
    %c0_49 = arith.constant 0 : index
    %124 = vector.load %arg12[%c0_48, %c0_49] : memref<16x256xbf16, #tpu.memory_space<vmem>>, vector<16x256xbf16>
    tpu.vector_store %arg12[%c0_48, %c0_49], %123 {strides = array<i32>} : memref<16x256xbf16, #tpu.memory_space<vmem>>, vector<16x256xbf16>,
    return
  }
  func.func @transform_0(%arg0: i32, %arg1: memref<1xi32, #tpu.memory_space<smem>>) -> (i32, i32) {
    %c0_i32 = arith.constant 0 : i32
    %c0_i32_0 = arith.constant 0 : i32
    return %arg0, %c0_i32 : i32, i32
  }
  func.func @transform_1(%arg0: i32, %arg1: memref<1xi32, #tpu.memory_space<smem>>) -> (i32, i32) {
    %c0_i32 = arith.constant 0 : i32
    %c0_i32_0 = arith.constant 0 : i32
    return %arg0, %c0_i32 : i32, i32
  }
  func.func @transform_2(%arg0: i32, %arg1: memref<1xi32, #tpu.memory_space<smem>>) -> (i32, i32) {
    %c0_i32 = arith.constant 0 : i32
    %c0_i32_0 = arith.constant 0 : i32
    %c0_i32_1 = arith.constant 0 : i32
    return %c0_i32, %c0_i32_0 : i32, i32
  }
  func.func @transform_3(%arg0: i32, %arg1: memref<1xi32, #tpu.memory_space<smem>>) -> (i32, i32) {
    %c0_i32 = arith.constant 0 : i32
    %c0_i32_0 = arith.constant 0 : i32
    %c0_i32_1 = arith.constant 0 : i32
    return %c0_i32, %c0_i32_0 : i32, i32
  }
  func.func @transform_4(%arg0: i32, %arg1: memref<1xi32, #tpu.memory_space<smem>>) -> (i32, i32) {
    %c0_i32 = arith.constant 0 : i32
    %c0_i32_0 = arith.constant 0 : i32
    %c0_i32_1 = arith.constant 0 : i32
    return %c0_i32, %c0_i32_0 : i32, i32
  }
  func.func @transform_5(%arg0: i32, %arg1: memref<1xi32, #tpu.memory_space<smem>>) -> (i32, i32) {
    %c0_i32 = arith.constant 0 : i32
    %c0_i32_0 = arith.constant 0 : i32
    %c0_i32_1 = arith.constant 0 : i32
    return %c0_i32, %c0_i32_0 : i32, i32
  }
  func.func @transform_6(%arg0: i32, %arg1: memref<1xi32, #tpu.memory_space<smem>>) -> (i32, i32) {
    %c0_i32 = arith.constant 0 : i32
    %c0_i32_0 = arith.constant 0 : i32
    %c0_i32_1 = arith.constant 0 : i32
    return %c0_i32, %c0_i32_0 : i32, i32
  }
  func.func @transform_7(%arg0: i32, %arg1: memref<1xi32, #tpu.memory_space<smem>>) -> (i32, i32) {
    %c0_i32 = arith.constant 0 : i32
    %c0_i32_0 = arith.constant 0 : i32
    %c0_i32_1 = arith.constant 0 : i32
    return %c0_i32, %c0_i32_0 : i32, i32
  }
  func.func @transform_8(%arg0: i32, %arg1: memref<1xi32, #tpu.memory_space<smem>>) -> (i32, i32) {
    %c0_i32 = arith.constant 0 : i32
    %c0_i32_0 = arith.constant 0 : i32
    %c0_i32_1 = arith.constant 0 : i32
    return %c0_i32, %c0_i32_0 : i32, i32
  }
  func.func @transform_9(%arg0: i32, %arg1: memref<1xi32, #tpu.memory_space<smem>>) -> (i32, i32) {
    %c0_i32 = arith.constant 0 : i32
    %c0_i32_0 = arith.constant 0 : i32
    %c0_i32_1 = arith.constant 0 : i32
    return %c0_i32, %c0_i32_0 : i32, i32
  }
  func.func @transform_10(%arg0: i32, %arg1: memref<1xi32, #tpu.memory_space<smem>>) -> (i32, i32) {
    %c0_i32 = arith.constant 0 : i32
    %c0_i32_0 = arith.constant 0 : i32
    return %arg0, %c0_i32 : i32, i32
  }
  func.func @transform_11(%arg0: i32, %arg1: memref<1xi32, #tpu.memory_space<smem>>) -> (i32, i32) {
    %c0_i32 = arith.constant 0 : i32
    %c0_i32_0 = arith.constant 0 : i32
    return %arg0, %c0_i32 : i32, i32
  }
}

</mosaic_0001>

<llo_original>
// kernel: vae_forward.1
$region0: #{vae_forward.1}
  #allocation0 [shape = 'u32[]', space=smem, size = 0x4, offset = 0x4, fixed_abs, tag = 'smem constant byte address 0x4 - core index']
  #allocation1 [shape = 'u32[144,128]{1,0:T(1,128)}', space=vmem, size = 0x12000, scoped, tag = 'internal scratch']
  #allocation2 [shape = 's32[1]{0}', space=sflag, size = 0x4, scoped, tag = 'scoped memory for vae_forward.1']
  #allocation3 [shape = 's32[1]{0:T(128)S(6)}', space=smem, size = 0x200, scoped, tag = 'prefetched SMEM operand 0']
  %s0 = inlined_call_operand.<no memory space> [shape: s32[1], index: 0, kind: input, shape index: {}]
  %s1 = inlined_call_operand.vmem [shape: bf16[16,256], index: 1, kind: input, shape index: {}]
  %s2 = inlined_call_operand.vmem [shape: bf16[16,128], index: 2, kind: input, shape index: {}]
  %s3 = inlined_call_operand.hbm [shape: bf16[256,512], index: 3, kind: input, shape index: {}]
  %s4 = inlined_call_operand.vmem [shape: f32[1,512], index: 4, kind: input, shape index: {}]
  %s5 = inlined_call_operand.hbm [shape: bf16[512,256], index: 5, kind: input, shape index: {}]
  %s6 = inlined_call_operand.vmem [shape: f32[1,256], index: 6, kind: input, shape index: {}]
  %s7 = inlined_call_operand.hbm [shape: bf16[128,512], index: 7, kind: input, shape index: {}]
  %s8 = inlined_call_operand.vmem [shape: f32[1,512], index: 8, kind: input, shape index: {}]
  %s9 = inlined_call_operand.hbm [shape: bf16[512,256], index: 9, kind: input, shape index: {}]
  %s10 = inlined_call_operand.vmem [shape: f32[1,256], index: 10, kind: input, shape index: {}]
  %s11 = inlined_call_operand.vmem [shape: bf16[16,256], index: 11, kind: output, shape index: {0}]
  %s12 = inlined_call_operand.vmem [shape: f32[16,1], index: 12, kind: output, shape index: {1}]
  %13 = xla_tuple %s11, %s12
  %s14 = sld [smem:[#allocation0]]
  $region74: #{vae_forward.1} parent=0
    _
  %s16 = ssub.s32 1, %s14
  %s17 = scalar_select 0, %s16, %s14
  %18 = sst [smem:[#allocation3]] %s0
  $region1: #{vae_forward.1} parent=0
    #allocation4 [shape = 'u8[262144]{0}', space=vmem, size = 0x40000, scoped, tag = 'input window, operand 3, single buffered']
    #allocation5 [shape = 's32[1]{0}', space=sflag, size = 0x4, scoped, tag = 'scoped memory for vae_forward.1']
    #allocation6 [shape = 'u8[262144]{0}', space=vmem, size = 0x40000, scoped, tag = 'input window, operand 5, single buffered']
    #allocation7 [shape = 's32[1]{0}', space=sflag, size = 0x4, scoped, tag = 'scoped memory for vae_forward.1']
    #allocation8 [shape = 'u8[131072]{0}', space=vmem, size = 0x20000, scoped, tag = 'input window, operand 7, single buffered']
    #allocation9 [shape = 'u8[262144]{0}', space=vmem, size = 0x40000, scoped, tag = 'input window, operand 9, single buffered']
    #allocation10 [shape = 's32[1]{0}', space=sflag, size = 0x4, scoped, tag = 'scoped memory for vae_forward.1']
    %19 = vsyncpa [#allocation5], 0
    %20 = vsyncpa [#allocation7], 0
    %21 = vsyncpa [#allocation10], 0
    // Predicated region
    $region2: #{vae_forward.1} parent=1 // pred_check
      _
    $region3: #{vae_forward.1} parent=1 // pred_check_branch
      %23 = sbr.rel (0) target = $region5
    $region4: #{vae_forward.1} parent=1 // pred_region
      _
    $region5: #{vae_forward.1} parent=1 // pred_fallthru
      _
    // Predicated region
    $region6: #{vae_forward.1} parent=1 // pred_check
      _
    $region7: #{vae_forward.1} parent=1 // pred_check_branch
      %25 = sbr.rel (0) target = $region9
    $region8: #{vae_forward.1} parent=1 // pred_region
      _
    $region9: #{vae_forward.1} parent=1 // pred_fallthru
      _
    // Predicated region
    $region10: #{vae_forward.1} parent=1 // pred_check
      _
    $region11: #{vae_forward.1} parent=1 // pred_check_branch
      %27 = sbr.rel (0) target = $region13
    $region12: #{vae_forward.1} parent=1 // pred_region
      %s29 = ssub.s32 8192, 8192
      %30 = vsyncadd [#allocation5], %s29
      %s31 = sshll.u32 [#allocation4], 4
      %s32 = int_to_ptr.vmem [resolvable:$true] %s31
      %37 = dma.hbm_to_vmem [thread:$0]  %s3, 8192, %s32, [#allocation5], 256, 256, 16
    $region13: #{vae_forward.1} parent=1 // pred_fallthru
      _
    // Predicated region
    $region14: #{vae_forward.1} parent=1 // pred_check
      _
    $region15: #{vae_forward.1} parent=1 // pred_check_branch
      %39 = sbr.rel (0) target = $region17
    $region16: #{vae_forward.1} parent=1 // pred_region
      _
    $region17: #{vae_forward.1} parent=1 // pred_fallthru
      _
    // Predicated region
    $region18: #{vae_forward.1} parent=1 // pred_check
      _
    $region19: #{vae_forward.1} parent=1 // pred_check_branch
      %41 = sbr.rel (0) target = $region21
    $region20: #{vae_forward.1} parent=1 // pred_region
      %s43 = ssub.s32 8192, 8192
      %44 = vsyncadd [#allocation7], %s43
      %s45 = sshll.u32 [#allocation6], 4
      %s46 = int_to_ptr.vmem [resolvable:$true] %s45
      %51 = dma.hbm_to_vmem [thread:$0]  %s5, 8192, %s46, [#allocation7], 128, 128, 8
    $region21: #{vae_forward.1} parent=1 // pred_fallthru
      _
    // Predicated region
    $region22: #{vae_forward.1} parent=1 // pred_check
      _
    $region23: #{vae_forward.1} parent=1 // pred_check_branch
      %53 = sbr.rel (0) target = $region25
    $region24: #{vae_forward.1} parent=1 // pred_region
      _
    $region25: #{vae_forward.1} parent=1 // pred_fallthru
      _
    // Predicated region
    $region26: #{vae_forward.1} parent=1 // pred_check
      _
    $region27: #{vae_forward.1} parent=1 // pred_check_branch
      %55 = sbr.rel (0) target = $region29
    $region28: #{vae_forward.1} parent=1 // pred_region
      %s57 = ssub.s32 4096, 4096
      %58 = vsyncadd [#allocation7], %s57
      %s59 = sshll.u32 [#allocation8], 4
      %s60 = int_to_ptr.vmem [resolvable:$true] %s59
      %65 = dma.hbm_to_vmem [thread:$0]  %s7, 4096, %s60, [#allocation7], 256, 256, 16
    $region29: #{vae_forward.1} parent=1 // pred_fallthru
      _
    // Predicated region
    $region30: #{vae_forward.1} parent=1 // pred_check
      _
    $region31: #{vae_forward.1} parent=1 // pred_check_branch
      %67 = sbr.rel (0) target = $region33
    $region32: #{vae_forward.1} parent=1 // pred_region
      _
    $region33: #{vae_forward.1} parent=1 // pred_fallthru
      _
    // Predicated region
    $region34: #{vae_forward.1} parent=1 // pred_check
      _
    $region35: #{vae_forward.1} parent=1 // pred_check_branch
      %69 = sbr.rel (0) target = $region37
    $region36: #{vae_forward.1} parent=1 // pred_region
      %s71 = ssub.s32 8192, 8192
      %72 = vsyncadd [#allocation10], %s71
      %s73 = sshll.u32 [#allocation9], 4
      %s74 = int_to_ptr.vmem [resolvable:$true] %s73
      %79 = dma.hbm_to_vmem [thread:$0]  %s9, 8192, %s74, [#allocation10], 128, 128, 8
    $region37: #{vae_forward.1} parent=1 // pred_fallthru
      _
    // Predicated region
    $region38: #{vae_forward.1} parent=1 // pred_check
      _
    $region39: #{vae_forward.1} parent=1 // pred_check_branch
      %81 = sbr.rel (0) target = $region41
    $region40: #{vae_forward.1} parent=1 // pred_region
      _
    $region41: #{vae_forward.1} parent=1 // pred_fallthru
      _
    // Predicated region
    $region42: #{vae_forward.1} parent=1 // pred_check
      _
    $region43: #{vae_forward.1} parent=1 // pred_check_branch
      %83 = sbr.rel (0) target = $region45
    $region44: #{vae_forward.1} parent=1 // pred_region
      %84 = dma.done [#allocation5], 8192
    $region45: #{vae_forward.1} parent=1 // pred_fallthru
      _
    // Predicated region
    $region46: #{vae_forward.1} parent=1 // pred_check
      _
    $region47: #{vae_forward.1} parent=1 // pred_check_branch
      %86 = sbr.rel (0) target = $region49
    $region48: #{vae_forward.1} parent=1 // pred_region
      %87 = dma.done [#allocation7], 8192
    $region49: #{vae_forward.1} parent=1 // pred_fallthru
      _
    // Predicated region
    $region50: #{vae_forward.1} parent=1 // pred_check
      _
    $region51: #{vae_forward.1} parent=1 // pred_check_branch
      %89 = sbr.rel (0) target = $region53
    $region52: #{vae_forward.1} parent=1 // pred_region
      %90 = dma.done [#allocation7], 4096
    $region53: #{vae_forward.1} parent=1 // pred_fallthru
      _
    // Predicated region
    $region54: #{vae_forward.1} parent=1 // pred_check
      _
    $region55: #{vae_forward.1} parent=1 // pred_check_branch
      %92 = sbr.rel (0) target = $region57
    $region56: #{vae_forward.1} parent=1 // pred_region
      %93 = dma.done [#allocation10], 8192
    $region57: #{vae_forward.1} parent=1 // pred_fallthru
      _
    %s95 = sld [smem:[#allocation3]]
    %s96 = smul.u32 0, 16777619
    %s97 = sxor.u32 %s95, %s96
    %s98 = sadd.s32 %s97, 1540483477
    %v99 = vld [vmem:[%s1] sm:$0xff]
    %v100 = vld [vmem:[%s1 + $0x8] sm:$0xff]
    %v101 = vld [vmem:[#allocation4] sm:$0xff]
    %v102 = vld [vmem:[#allocation4 + $0x8] sm:$0xff]
    %v103 = vld [vmem:[#allocation4 + $0x10] sm:$0xff]
    %v104 = vld [vmem:[#allocation4 + $0x18] sm:$0xff]
    %v105 = vld [vmem:[#allocation4 + $0x20] sm:$0xff]
    %v106 = vld [vmem:[#allocation4 + $0x28] sm:$0xff]
    %v107 = vld [vmem:[#allocation4 + $0x30] sm:$0xff]
    %v108 = vld [vmem:[#allocation4 + $0x38] sm:$0xff]
    %v109 = vld [vmem:[#allocation4 + $0x40] sm:$0xff]
    %v110 = vld [vmem:[#allocation4 + $0x48] sm:$0xff]
    %v111 = vld [vmem:[#allocation4 + $0x50] sm:$0xff]
    %v112 = vld [vmem:[#allocation4 + $0x58] sm:$0xff]
    %v113 = vld [vmem:[#allocation4 + $0x60] sm:$0xff]
    %v114 = vld [vmem:[#allocation4 + $0x68] sm:$0xff]
    %v115 = vld [vmem:[#allocation4 + $0x70] sm:$0xff]
    %v116 = vld [vmem:[#allocation4 + $0x78] sm:$0xff]
    %v117 = vld [vmem:[#allocation4 + $0x80] sm:$0xff]
    %v118 = vld [vmem:[#allocation4 + $0x88] sm:$0xff]
    %v119 = vld [vmem:[#allocation4 + $0x90] sm:$0xff]
    %v120 = vld [vmem:[#allocation4 + $0x98] sm:$0xff]
    %v121 = vld [vmem:[#allocation4 + $0xa0] sm:$0xff]
    %v122 = vld [vmem:[#allocation4 + $0xa8] sm:$0xff]
    %v123 = vld [vmem:[#allocation4 + $0xb0] sm:$0xff]
    %v124 = vld [vmem:[#allocation4 + $0xb8] sm:$0xff]
    %v125 = vld [vmem:[#allocation4 + $0xc0] sm:$0xff]
    %v126 = vld [vmem:[#allocation4 + $0xc8] sm:$0xff]
    %v127 = vld [vmem:[#allocation4 + $0xd0] sm:$0xff]
    %v128 = vld [vmem:[#allocation4 + $0xd8] sm:$0xff]
    %v129 = vld [vmem:[#allocation4 + $0xe0] sm:$0xff]
    %v130 = vld [vmem:[#allocation4 + $0xe8] sm:$0xff]
    %v131 = vld [vmem:[#allocation4 + $0xf0] sm:$0xff]
    %v132 = vld [vmem:[#allocation4 + $0xf8] sm:$0xff]
    %v133 = vld [vmem:[#allocation4 + $0x100] sm:$0xff]
    %v134 = vld [vmem:[#allocation4 + $0x108] sm:$0xff]
    %v135 = vld [vmem:[#allocation4 + $0x110] sm:$0xff]
    %v136 = vld [vmem:[#allocation4 + $0x118] sm:$0xff]
    %v137 = vld [vmem:[#allocation4 + $0x120] sm:$0xff]
    %v138 = vld [vmem:[#allocation4 + $0x128] sm:$0xff]
    %v139 = vld [vmem:[#allocation4 + $0x130] sm:$0xff]
    %v140 = vld [vmem:[#allocation4 + $0x138] sm:$0xff]
    %v141 = vld [vmem:[#allocation4 + $0x140] sm:$0xff]
    %v142 = vld [vmem:[#allocation4 + $0x148] sm:$0xff]
    %v143 = vld [vmem:[#allocation4 + $0x150] sm:$0xff]
    %v144 = vld [vmem:[#allocation4 + $0x158] sm:$0xff]
    %v145 = vld [vmem:[#allocation4 + $0x160] sm:$0xff]
    %v146 = vld [vmem:[#allocation4 + $0x168] sm:$0xff]
    %v147 = vld [vmem:[#allocation4 + $0x170] sm:$0xff]
    %v148 = vld [vmem:[#allocation4 + $0x178] sm:$0xff]
    %v149 = vld [vmem:[#allocation4 + $0x180] sm:$0xff]
    %v150 = vld [vmem:[#allocation4 + $0x188] sm:$0xff]
    %v151 = vld [vmem:[#allocation4 + $0x190] sm:$0xff]
    %v152 = vld [vmem:[#allocation4 + $0x198] sm:$0xff]
    %v153 = vld [vmem:[#allocation4 + $0x1a0] sm:$0xff]
    %v154 = vld [vmem:[#allocation4 + $0x1a8] sm:$0xff]
    %v155 = vld [vmem:[#allocation4 + $0x1b0] sm:$0xff]
    %v156 = vld [vmem:[#allocation4 + $0x1b8] sm:$0xff]
    %v157 = vld [vmem:[#allocation4 + $0x1c0] sm:$0xff]
    %v158 = vld [vmem:[#allocation4 + $0x1c8] sm:$0xff]
    %v159 = vld [vmem:[#allocation4 + $0x1d0] sm:$0xff]
    %v160 = vld [vmem:[#allocation4 + $0x1d8] sm:$0xff]
    %v161 = vld [vmem:[#allocation4 + $0x1e0] sm:$0xff]
    %v162 = vld [vmem:[#allocation4 + $0x1e8] sm:$0xff]
    %v163 = vld [vmem:[#allocation4 + $0x1f0] sm:$0xff]
    %v164 = vld [vmem:[#allocation4 + $0x1f8] sm:$0xff]
    %v165 = vld [vmem:[%s4] sm:$0xf]
    %v167 = vlaneseq
    %v168 = vshrl.u32 %v167, 7
    %v169 = vsub.s32 0, %v168
    %v170 = vrot.slane %v165, %v169
    %v171 = vlaneseq
    %v172 = vshrl.u32 %v171, 7
    %v173 = vsub.s32 1, %v172
    %v174 = vrot.slane %v165, %v173
    %v175 = vlaneseq
    %v176 = vshrl.u32 %v175, 7
    %v177 = vsub.s32 2, %v176
    %v178 = vrot.slane %v165, %v177
    %v179 = vlaneseq
    %v180 = vshrl.u32 %v179, 7
    %v181 = vsub.s32 3, %v180
    %v182 = vrot.slane %v165, %v181
    %v189 = vunpack.c.l.b16 %v99
    %v190 = vunpack.c.h.b16 %v99
    %v191 = vunpack.c.l.b16 %v100
    %v192 = vunpack.c.h.b16 %v100
    %v193 = vpack.c.b16 %v191, %v189
    %v194 = vpack.c.b16 %v192, %v190
    %v261 = vunpack.c.l.b16 %v101
    %v262 = vunpack.c.h.b16 %v101
    %v263 = vunpack.c.l.b16 %v102
    %v264 = vunpack.c.h.b16 %v102
    %v265 = vunpack.c.l.b16 %v103
    %v266 = vunpack.c.h.b16 %v103
    %v267 = vunpack.c.l.b16 %v104
    %v268 = vunpack.c.h.b16 %v104
    %v269 = vunpack.c.l.b16 %v105
    %v270 = vunpack.c.h.b16 %v105
    %v271 = vunpack.c.l.b16 %v106
    %v272 = vunpack.c.h.b16 %v106
    %v273 = vunpack.c.l.b16 %v107
    %v274 = vunpack.c.h.b16 %v107
    %v275 = vunpack.c.l.b16 %v108
    %v276 = vunpack.c.h.b16 %v108
    %v277 = vunpack.c.l.b16 %v109
    %v278 = vunpack.c.h.b16 %v109
    %v279 = vunpack.c.l.b16 %v110
    %v280 = vunpack.c.h.b16 %v110
    %v281 = vunpack.c.l.b16 %v111
    %v282 = vunpack.c.h.b16 %v111
    %v283 = vunpack.c.l.b16 %v112
    %v284 = vunpack.c.h.b16 %v112
    %v285 = vunpack.c.l.b16 %v113
    %v286 = vunpack.c.h.b16 %v113
    %v287 = vunpack.c.l.b16 %v114
    %v288 = vunpack.c.h.b16 %v114
    %v289 = vunpack.c.l.b16 %v115
    %v290 = vunpack.c.h.b16 %v115
    %v291 = vunpack.c.l.b16 %v116
    %v292 = vunpack.c.h.b16 %v116
    %v293 = vunpack.c.l.b16 %v117
    %v294 = vunpack.c.h.b16 %v117
    %v295 = vunpack.c.l.b16 %v118
    %v296 = vunpack.c.h.b16 %v118
    %v297 = vunpack.c.l.b16 %v119
    %v298 = vunpack.c.h.b16 %v119
    %v299 = vunpack.c.l.b16 %v120
    %v300 = vunpack.c.h.b16 %v120
    %v301 = vunpack.c.l.b16 %v121
    %v302 = vunpack.c.h.b16 %v121
    %v303 = vunpack.c.l.b16 %v122
    %v304 = vunpack.c.h.b16 %v122
    %v305 = vunpack.c.l.b16 %v123
    %v306 = vunpack.c.h.b16 %v123
    %v307 = vunpack.c.l.b16 %v124
    %v308 = vunpack.c.h.b16 %v124
    %v309 = vunpack.c.l.b16 %v125
    %v310 = vunpack.c.h.b16 %v125
    %v311 = vunpack.c.l.b16 %v126
    %v312 = vunpack.c.h.b16 %v126
    %v313 = vunpack.c.l.b16 %v127
    %v314 = vunpack.c.h.b16 %v127
    %v315 = vunpack.c.l.b16 %v128
    %v316 = vunpack.c.h.b16 %v128
    %v317 = vunpack.c.l.b16 %v129
    %v318 = vunpack.c.h.b16 %v129
    %v319 = vunpack.c.l.b16 %v130
    %v320 = vunpack.c.h.b16 %v130
    %v321 = vunpack.c.l.b16 %v131
    %v322 = vunpack.c.h.b16 %v131
    %v323 = vunpack.c.l.b16 %v132
    %v324 = vunpack.c.h.b16 %v132
    %v325 = vunpack.c.l.b16 %v133
    %v326 = vunpack.c.h.b16 %v133
    %v327 = vunpack.c.l.b16 %v134
    %v328 = vunpack.c.h.b16 %v134
    %v329 = vunpack.c.l.b16 %v135
    %v330 = vunpack.c.h.b16 %v135
    %v331 = vunpack.c.l.b16 %v136
    %v332 = vunpack.c.h.b16 %v136
    %v333 = vunpack.c.l.b16 %v137
    %v334 = vunpack.c.h.b16 %v137
    %v335 = vunpack.c.l.b16 %v138
    %v336 = vunpack.c.h.b16 %v138
    %v337 = vunpack.c.l.b16 %v139
    %v338 = vunpack.c.h.b16 %v139
    %v339 = vunpack.c.l.b16 %v140
    %v340 = vunpack.c.h.b16 %v140
    %v341 = vunpack.c.l.b16 %v141
    %v342 = vunpack.c.h.b16 %v141
    %v343 = vunpack.c.l.b16 %v142
    %v344 = vunpack.c.h.b16 %v142
    %v345 = vunpack.c.l.b16 %v143
    %v346 = vunpack.c.h.b16 %v143
    %v347 = vunpack.c.l.b16 %v144
    %v348 = vunpack.c.h.b16 %v144
    %v349 = vunpack.c.l.b16 %v145
    %v350 = vunpack.c.h.b16 %v145
    %v351 = vunpack.c.l.b16 %v146
    %v352 = vunpack.c.h.b16 %v146
    %v353 = vunpack.c.l.b16 %v147
    %v354 = vunpack.c.h.b16 %v147
    %v355 = vunpack.c.l.b16 %v148
    %v356 = vunpack.c.h.b16 %v148
    %v357 = vunpack.c.l.b16 %v149
    %v358 = vunpack.c.h.b16 %v149
    %v359 = vunpack.c.l.b16 %v150
    %v360 = vunpack.c.h.b16 %v150
    %v361 = vunpack.c.l.b16 %v151
    %v362 = vunpack.c.h.b16 %v151
    %v363 = vunpack.c.l.b16 %v152
    %v364 = vunpack.c.h.b16 %v152
    %v365 = vunpack.c.l.b16 %v153
    %v366 = vunpack.c.h.b16 %v153
    %v367 = vunpack.c.l.b16 %v154
    %v368 = vunpack.c.h.b16 %v154
    %v369 = vunpack.c.l.b16 %v155
    %v370 = vunpack.c.h.b16 %v155
    %v371 = vunpack.c.l.b16 %v156
    %v372 = vunpack.c.h.b16 %v156
    %v373 = vunpack.c.l.b16 %v157
    %v374 = vunpack.c.h.b16 %v157
    %v375 = vunpack.c.l.b16 %v158
    %v376 = vunpack.c.h.b16 %v158
    %v377 = vunpack.c.l.b16 %v159
    %v378 = vunpack.c.h.b16 %v159
    %v379 = vunpack.c.l.b16 %v160
    %v380 = vunpack.c.h.b16 %v160
    %v381 = vunpack.c.l.b16 %v161
    %v382 = vunpack.c.h.b16 %v161
    %v383 = vunpack.c.l.b16 %v162
    %v384 = vunpack.c.h.b16 %v162
    %v385 = vunpack.c.l.b16 %v163
    %v386 = vunpack.c.h.b16 %v163
    %v387 = vunpack.c.l.b16 %v164
    %v388 = vunpack.c.h.b16 %v164
    %v389 = vpack.c.b16 %v265, %v261
    %v390 = vpack.c.b16 %v266, %v262
    %v391 = vpack.c.b16 %v267, %v263
    %v392 = vpack.c.b16 %v268, %v264
    %v393 = vpack.c.b16 %v273, %v269
    %v394 = vpack.c.b16 %v274, %v270
    %v395 = vpack.c.b16 %v275, %v271
    %v396 = vpack.c.b16 %v276, %v272
    %v397 = vpack.c.b16 %v281, %v277
    %v398 = vpack.c.b16 %v282, %v278
    %v399 = vpack.c.b16 %v283, %v279
    %v400 = vpack.c.b16 %v284, %v280
    %v401 = vpack.c.b16 %v289, %v285
    %v402 = vpack.c.b16 %v290, %v286
    %v403 = vpack.c.b16 %v291, %v287
    %v404 = vpack.c.b16 %v292, %v288
    %v405 = vpack.c.b16 %v297, %v293
    %v406 = vpack.c.b16 %v298, %v294
    %v407 = vpack.c.b16 %v299, %v295
    %v408 = vpack.c.b16 %v300, %v296
    %v409 = vpack.c.b16 %v305, %v301
    %v410 = vpack.c.b16 %v306, %v302
    %v411 = vpack.c.b16 %v307, %v303
    %v412 = vpack.c.b16 %v308, %v304
    %v413 = vpack.c.b16 %v313, %v309
    %v414 = vpack.c.b16 %v314, %v310
    %v415 = vpack.c.b16 %v315, %v311
    %v416 = vpack.c.b16 %v316, %v312
    %v417 = vpack.c.b16 %v321, %v317
    %v418 = vpack.c.b16 %v322, %v318
    %v419 = vpack.c.b16 %v323, %v319
    %v420 = vpack.c.b16 %v324, %v320
    %v421 = vpack.c.b16 %v329, %v325
    %v422 = vpack.c.b16 %v330, %v326
    %v423 = vpack.c.b16 %v331, %v327
    %v424 = vpack.c.b16 %v332, %v328
    %v425 = vpack.c.b16 %v337, %v333
    %v426 = vpack.c.b16 %v338, %v334
    %v427 = vpack.c.b16 %v339, %v335
    %v428 = vpack.c.b16 %v340, %v336
    %v429 = vpack.c.b16 %v345, %v341
    %v430 = vpack.c.b16 %v346, %v342
    %v431 = vpack.c.b16 %v347, %v343
    %v432 = vpack.c.b16 %v348, %v344
    %v433 = vpack.c.b16 %v353, %v349
    %v434 = vpack.c.b16 %v354, %v350
    %v435 = vpack.c.b16 %v355, %v351
    %v436 = vpack.c.b16 %v356, %v352
    %v437 = vpack.c.b16 %v361, %v357
    %v438 = vpack.c.b16 %v362, %v358
    %v439 = vpack.c.b16 %v363, %v359
    %v440 = vpack.c.b16 %v364, %v360
    %v441 = vpack.c.b16 %v369, %v365
    %v442 = vpack.c.b16 %v370, %v366
    %v443 = vpack.c.b16 %v371, %v367
    %v444 = vpack.c.b16 %v372, %v368
    %v445 = vpack.c.b16 %v377, %v373
    %v446 = vpack.c.b16 %v378, %v374
    %v447 = vpack.c.b16 %v379, %v375
    %v448 = vpack.c.b16 %v380, %v376
    %v449 = vpack.c.b16 %v385, %v381
    %v450 = vpack.c.b16 %v386, %v382
    %v451 = vpack.c.b16 %v387, %v383
    %v452 = vpack.c.b16 %v388, %v384
    %517 = vmatprep.subr.bf16.mxu0 %v390
    %518 = vmatpush1.bf16.msra.mxu0 %v389
    %519 = vmatprep.subr.bf16.mxu0 %v394
    %520 = vmatpush1.bf16.msra.mxu0 %v393
    %521 = vmatprep.subr.bf16.mxu0 %v398
    %522 = vmatpush1.bf16.msra.mxu0 %v397
    %523 = vmatprep.subr.bf16.mxu0 %v402
    %524 = vmatpush1.bf16.msra.mxu0 %v401
    %525 = vmatprep.subr.bf16.mxu0 %v406
    %526 = vmatpush1.bf16.msra.mxu0 %v405
    %527 = vmatprep.subr.bf16.mxu0 %v410
    %528 = vmatpush1.bf16.msra.mxu0 %v409
    %529 = vmatprep.subr.bf16.mxu0 %v414
    %530 = vmatpush1.bf16.msra.mxu0 %v413
    %531 = vmatprep.subr.bf16.mxu0 %v418
    %532 = vmatpush1.bf16.msra.mxu0 %v417
    %533 = vmatprep.subr.bf16.mxu0 %v422
    %534 = vmatpush1.bf16.msra.mxu0 %v421
    %535 = vmatprep.subr.bf16.mxu0 %v426
    %536 = vmatpush1.bf16.msra.mxu0 %v425
    %537 = vmatprep.subr.bf16.mxu0 %v430
    %538 = vmatpush1.bf16.msra.mxu0 %v429
    %539 = vmatprep.subr.bf16.mxu0 %v434
    %540 = vmatpush1.bf16.msra.mxu0 %v433
    %541 = vmatprep.subr.bf16.mxu0 %v438
    %542 = vmatpush1.bf16.msra.mxu0 %v437
    %543 = vmatprep.subr.bf16.mxu0 %v442
    %544 = vmatpush1.bf16.msra.mxu0 %v441
    %545 = vmatprep.subr.bf16.mxu0 %v446
    %546 = vmatpush1.bf16.msra.mxu0 %v445
    %547 = vmatprep.subr.bf16.mxu0 %v450
    %548 = vmatpush1.bf16.msra.mxu0 %v449
    %549 = vmatprep.mubr.bf16.mxu0 %v194
    %550 = vmatmul.mubr.bf16.gmra.mrb[0].mxu0 %v193
    %v551 = vpop.f32.mrb[0].mxu0
    %v552 = vadd.f32 %v170, %v551
    %v553 = vpop.f32.mrb[0].mxu0
    %v554 = vadd.f32 %v174, %v553
    %v555 = vpop.f32.mrb[0].mxu0
    %v556 = vadd.f32 %v170, %v555
    %v557 = vpop.f32.mrb[0].mxu0
    %v558 = vadd.f32 %v174, %v557
    %559 = vdwg.mxu0
    %560 = vmatprep.subr.bf16.mxu0 %v392
    %561 = vmatpush1.bf16.msra.mxu0 %v391
    %562 = vmatprep.subr.bf16.mxu0 %v396
    %563 = vmatpush1.bf16.msra.mxu0 %v395
    %564 = vmatprep.subr.bf16.mxu0 %v400
    %565 = vmatpush1.bf16.msra.mxu0 %v399
    %566 = vmatprep.subr.bf16.mxu0 %v404
    %567 = vmatpush1.bf16.msra.mxu0 %v403
    %568 = vmatprep.subr.bf16.mxu0 %v408
    %569 = vmatpush1.bf16.msra.mxu0 %v407
    %570 = vmatprep.subr.bf16.mxu0 %v412
    %571 = vmatpush1.bf16.msra.mxu0 %v411
    %572 = vmatprep.subr.bf16.mxu0 %v416
    %573 = vmatpush1.bf16.msra.mxu0 %v415
    %574 = vmatprep.subr.bf16.mxu0 %v420
    %575 = vmatpush1.bf16.msra.mxu0 %v419
    %576 = vmatprep.subr.bf16.mxu0 %v424
    %577 = vmatpush1.bf16.msra.mxu0 %v423
    %578 = vmatprep.subr.bf16.mxu0 %v428
    %579 = vmatpush1.bf16.msra.mxu0 %v427
    %580 = vmatprep.subr.bf16.mxu0 %v432
    %581 = vmatpush1.bf16.msra.mxu0 %v431
    %582 = vmatprep.subr.bf16.mxu0 %v436
    %583 = vmatpush1.bf16.msra.mxu0 %v435
    %584 = vmatprep.subr.bf16.mxu0 %v440
    %585 = vmatpush1.bf16.msra.mxu0 %v439
    %586 = vmatprep.subr.bf16.mxu0 %v444
    %587 = vmatpush1.bf16.msra.mxu0 %v443
    %588 = vmatprep.subr.bf16.mxu0 %v448
    %589 = vmatpush1.bf16.msra.mxu0 %v447
    %590 = vmatprep.subr.bf16.mxu0 %v452
    %591 = vmatpush1.bf16.msra.mxu0 %v451
    %592 = vmatprep.mubr.bf16.mxu0 %v194
    %593 = vmatmul.mubr.bf16.gmra.mrb[0].mxu0 %v193
    %v594 = vpop.f32.mrb[0].mxu0
    %v595 = vadd.f32 %v178, %v594
    %v596 = vpop.f32.mrb[0].mxu0
    %v597 = vadd.f32 %v182, %v596
    %v598 = vpop.f32.mrb[0].mxu0
    %v599 = vadd.f32 %v178, %v598
    %v600 = vpop.f32.mrb[0].mxu0
    %v601 = vadd.f32 %v182, %v600
    %602 = vdwg.mxu0
    %v603 = vmax.f32 %v552, 0.0
    %v604 = vmax.f32 %v554, 0.0
    %v605 = vmax.f32 %v595, 0.0
    %v606 = vmax.f32 %v597, 0.0
    %v607 = vmax.f32 %v556, 0.0
    %v608 = vmax.f32 %v558, 0.0
    %v609 = vmax.f32 %v599, 0.0
    %v610 = vmax.f32 %v601, 0.0
    %v611 = vlaneseq
    %v612 = vshrl.u32 %v611, 7
    %v613 = vadd.s32 %v612, 8
    %v614 = vlaneseq
    %v615 = vand.u32 %v614, 127
    %v616 = vadd.s32 %v615, 128
    %v617 = vadd.s32 %v615, 256
    %v618 = vadd.s32 %v615, 384
    %v619 = vshll.u32 %v612, 10
    %v620 = vshll.u32 %v613, 10
    %v621 = vxor.u32 %v619, %v615
    %v622 = vxor.u32 %v619, %v616
    %v623 = vxor.u32 %v619, %v617
    %v624 = vxor.u32 %v619, %v618
    %v625 = vxor.u32 %v620, %v615
    %v626 = vxor.u32 %v620, %v616
    %v627 = vxor.u32 %v620, %v617
    %v628 = vxor.u32 %v620, %v618
    %v629 = vstv %s97
    %v630 = vxor.u32 %v621, %v629
    %v631 = vxor.u32 %v622, %v629
    %v632 = vxor.u32 %v623, %v629
    %v633 = vxor.u32 %v624, %v629
    %v634 = vxor.u32 %v625, %v629
    %v635 = vxor.u32 %v626, %v629
    %v636 = vxor.u32 %v627, %v629
    %v637 = vxor.u32 %v628, %v629
    %v638 = vshll.u32 %v630, 13
    %v639 = vshll.u32 %v631, 13
    %v640 = vshll.u32 %v632, 13
    %v641 = vshll.u32 %v633, 13
    %v642 = vshll.u32 %v634, 13
    %v643 = vshll.u32 %v635, 13
    %v644 = vshll.u32 %v636, 13
    %v645 = vshll.u32 %v637, 13
    %v646 = vxor.u32 %v630, %v638
    %v647 = vxor.u32 %v631, %v639
    %v648 = vxor.u32 %v632, %v640
    %v649 = vxor.u32 %v633, %v641
    %v650 = vxor.u32 %v634, %v642
    %v651 = vxor.u32 %v635, %v643
    %v652 = vxor.u32 %v636, %v644
    %v653 = vxor.u32 %v637, %v645
    %v654 = vshrl.u32 %v646, 17
    %v655 = vshrl.u32 %v647, 17
    %v656 = vshrl.u32 %v648, 17
    %v657 = vshrl.u32 %v649, 17
    %v658 = vshrl.u32 %v650, 17
    %v659 = vshrl.u32 %v651, 17
    %v660 = vshrl.u32 %v652, 17
    %v661 = vshrl.u32 %v653, 17
    %v662 = vxor.u32 %v646, %v654
    %v663 = vxor.u32 %v647, %v655
    %v664 = vxor.u32 %v648, %v656
    %v665 = vxor.u32 %v649, %v657
    %v666 = vxor.u32 %v650, %v658
    %v667 = vxor.u32 %v651, %v659
    %v668 = vxor.u32 %v652, %v660
    %v669 = vxor.u32 %v653, %v661
    %v670 = vshll.u32 %v662, 5
    %v671 = vshll.u32 %v663, 5
    %v672 = vshll.u32 %v664, 5
    %v673 = vshll.u32 %v665, 5
    %v674 = vshll.u32 %v666, 5
    %v675 = vshll.u32 %v667, 5
    %v676 = vshll.u32 %v668, 5
    %v677 = vshll.u32 %v669, 5
    %v678 = vxor.u32 %v662, %v670
    %v679 = vxor.u32 %v663, %v671
    %v680 = vxor.u32 %v664, %v672
    %v681 = vxor.u32 %v665, %v673
    %v682 = vxor.u32 %v666, %v674
    %v683 = vxor.u32 %v667, %v675
    %v684 = vxor.u32 %v668, %v676
    %v685 = vxor.u32 %v669, %v677
    %v686 = vadd.s32 %v678, 1013904223
    %v687 = vadd.s32 %v679, 1013904223
    %v688 = vadd.s32 %v680, 1013904223
    %v689 = vadd.s32 %v681, 1013904223
    %v690 = vadd.s32 %v682, 1013904223
    %v691 = vadd.s32 %v683, 1013904223
    %v692 = vadd.s32 %v684, 1013904223
    %v693 = vadd.s32 %v685, 1013904223
    %v694 = vshll.u32 %v686, 13
    %v695 = vshll.u32 %v687, 13
    %v696 = vshll.u32 %v688, 13
    %v697 = vshll.u32 %v689, 13
    %v698 = vshll.u32 %v690, 13
    %v699 = vshll.u32 %v691, 13
    %v700 = vshll.u32 %v692, 13
    %v701 = vshll.u32 %v693, 13
    %v702 = vxor.u32 %v686, %v694
    %v703 = vxor.u32 %v687, %v695
    %v704 = vxor.u32 %v688, %v696
    %v705 = vxor.u32 %v689, %v697
    %v706 = vxor.u32 %v690, %v698
    %v707 = vxor.u32 %v691, %v699
    %v708 = vxor.u32 %v692, %v700
    %v709 = vxor.u32 %v693, %v701
    %v710 = vshrl.u32 %v702, 17
    %v711 = vshrl.u32 %v703, 17
    %v712 = vshrl.u32 %v704, 17
    %v713 = vshrl.u32 %v705, 17
    %v714 = vshrl.u32 %v706, 17
    %v715 = vshrl.u32 %v707, 17
    %v716 = vshrl.u32 %v708, 17
    %v717 = vshrl.u32 %v709, 17
    %v718 = vxor.u32 %v702, %v710
    %v719 = vxor.u32 %v703, %v711
    %v720 = vxor.u32 %v704, %v712
    %v721 = vxor.u32 %v705, %v713
    %v722 = vxor.u32 %v706, %v714
    %v723 = vxor.u32 %v707, %v715
    %v724 = vxor.u32 %v708, %v716
    %v725 = vxor.u32 %v709, %v717
    %v726 = vshll.u32 %v718, 5
    %v727 = vshll.u32 %v719, 5
    %v728 = vshll.u32 %v720, 5
    %v729 = vshll.u32 %v721, 5
    %v730 = vshll.u32 %v722, 5
    %v731 = vshll.u32 %v723, 5
    %v732 = vshll.u32 %v724, 5
    %v733 = vshll.u32 %v725, 5
    %v734 = vxor.u32 %v718, %v726
    %v735 = vxor.u32 %v719, %v727
    %v736 = vxor.u32 %v720, %v728
    %v737 = vxor.u32 %v721, %v729
    %v738 = vxor.u32 %v722, %v730
    %v739 = vxor.u32 %v723, %v731
    %v740 = vxor.u32 %v724, %v732
    %v741 = vxor.u32 %v725, %v733
    %v742 = vand.u32 %v734, 2147483647
    %v743 = vand.u32 %v735, 2147483647
    %v744 = vand.u32 %v736, 2147483647
    %v745 = vand.u32 %v737, 2147483647
    %v746 = vand.u32 %v738, 2147483647
    %v747 = vand.u32 %v739, 2147483647
    %v748 = vand.u32 %v740, 2147483647
    %v749 = vand.u32 %v741, 2147483647
    %vm750 = vcmp.lt.s32.totalorder %v742, 1825361100
    %vm751 = vcmp.lt.s32.totalorder %v743, 1825361100
    %vm752 = vcmp.lt.s32.totalorder %v744, 1825361100
    %vm753 = vcmp.lt.s32.totalorder %v745, 1825361100
    %vm754 = vcmp.lt.s32.totalorder %v746, 1825361100
    %vm755 = vcmp.lt.s32.totalorder %v747, 1825361100
    %vm756 = vcmp.lt.s32.totalorder %v748, 1825361100
    %vm757 = vcmp.lt.s32.totalorder %v749, 1825361100
    %v758 = vsel %vm750, %v603, 0.0
    %v759 = vsel %vm751, %v604, 0.0
    %v760 = vsel %vm752, %v605, 0.0
    %v761 = vsel %vm753, %v606, 0.0
    %v762 = vsel %vm754, %v607, 0.0
    %v763 = vsel %vm755, %v608, 0.0
    %v764 = vsel %vm756, %v609, 0.0
    %v765 = vsel %vm757, %v610, 0.0
    %v766 = vpack.c.bf16 %v762, %v758
    %v767 = vpack.c.bf16 %v763, %v759
    %v768 = vpack.c.bf16 %v764, %v760
    %v769 = vpack.c.bf16 %v765, %v761
    %v770 = vld [vmem:[#allocation6] sm:$0xff]
    %v771 = vld [vmem:[#allocation6 + $0x8] sm:$0xff]
    %v772 = vld [vmem:[#allocation6 + $0x10] sm:$0xff]
    %v773 = vld [vmem:[#allocation6 + $0x18] sm:$0xff]
    %v774 = vld [vmem:[#allocation6 + $0x20] sm:$0xff]
    %v775 = vld [vmem:[#allocation6 + $0x28] sm:$0xff]
    %v776 = vld [vmem:[#allocation6 + $0x30] sm:$0xff]
    %v777 = vld [vmem:[#allocation6 + $0x38] sm:$0xff]
    %v778 = vld [vmem:[#allocation6 + $0x40] sm:$0xff]
    %v779 = vld [vmem:[#allocation6 + $0x48] sm:$0xff]
    %v780 = vld [vmem:[#allocation6 + $0x50] sm:$0xff]
    %v781 = vld [vmem:[#allocation6 + $0x58] sm:$0xff]
    %v782 = vld [vmem:[#allocation6 + $0x60] sm:$0xff]
    %v783 = vld [vmem:[#allocation6 + $0x68] sm:$0xff]
    %v784 = vld [vmem:[#allocation6 + $0x70] sm:$0xff]
    %v785 = vld [vmem:[#allocation6 + $0x78] sm:$0xff]
    %v786 = vld [vmem:[#allocation6 + $0x80] sm:$0xff]
    %v787 = vld [vmem:[#allocation6 + $0x88] sm:$0xff]
    %v788 = vld [vmem:[#allocation6 + $0x90] sm:$0xff]
    %v789 = vld [vmem:[#allocation6 + $0x98] sm:$0xff]
    %v790 = vld [vmem:[#allocation6 + $0xa0] sm:$0xff]
    %v791 = vld [vmem:[#allocation6 + $0xa8] sm:$0xff]
    %v792 = vld [vmem:[#allocation6 + $0xb0] sm:$0xff]
    %v793 = vld [vmem:[#allocation6 + $0xb8] sm:$0xff]
    %v794 = vld [vmem:[#allocation6 + $0xc0] sm:$0xff]
    %v795 = vld [vmem:[#allocation6 + $0xc8] sm:$0xff]
    %v796 = vld [vmem:[#allocation6 + $0xd0] sm:$0xff]
    %v797 = vld [vmem:[#allocation6 + $0xd8] sm:$0xff]
    %v798 = vld [vmem:[#allocation6 + $0xe0] sm:$0xff]
    %v799 = vld [vmem:[#allocation6 + $0xe8] sm:$0xff]
    %v800 = vld [vmem:[#allocation6 + $0xf0] sm:$0xff]
    %v801 = vld [vmem:[#allocation6 + $0xf8] sm:$0xff]
    %v802 = vld [vmem:[#allocation6 + $0x100] sm:$0xff]
    %v803 = vld [vmem:[#allocation6 + $0x108] sm:$0xff]
    %v804 = vld [vmem:[#allocation6 + $0x110] sm:$0xff]
    %v805 = vld [vmem:[#allocation6 + $0x118] sm:$0xff]
    %v806 = vld [vmem:[#allocation6 + $0x120] sm:$0xff]
    %v807 = vld [vmem:[#allocation6 + $0x128] sm:$0xff]
    %v808 = vld [vmem:[#allocation6 + $0x130] sm:$0xff]
    %v809 = vld [vmem:[#allocation6 + $0x138] sm:$0xff]
    %v810 = vld [vmem:[#allocation6 + $0x140] sm:$0xff]
    %v811 = vld [vmem:[#allocation6 + $0x148] sm:$0xff]
    %v812 = vld [vmem:[#allocation6 + $0x150] sm:$0xff]
    %v813 = vld [vmem:[#allocation6 + $0x158] sm:$0xff]
    %v814 = vld [vmem:[#allocation6 + $0x160] sm:$0xff]
    %v815 = vld [vmem:[#allocation6 + $0x168] sm:$0xff]
    %v816 = vld [vmem:[#allocation6 + $0x170] sm:$0xff]
    %v817 = vld [vmem:[#allocation6 + $0x178] sm:$0xff]
    %v818 = vld [vmem:[#allocation6 + $0x180] sm:$0xff]
    %v819 = vld [vmem:[#allocation6 + $0x188] sm:$0xff]
    %v820 = vld [vmem:[#allocation6 + $0x190] sm:$0xff]
    %v821 = vld [vmem:[#allocation6 + $0x198] sm:$0xff]
    %v822 = vld [vmem:[#allocation6 + $0x1a0] sm:$0xff]
    %v823 = vld [vmem:[#allocation6 + $0x1a8] sm:$0xff]
    %v824 = vld [vmem:[#allocation6 + $0x1b0] sm:$0xff]
    %v825 = vld [vmem:[#allocation6 + $0x1b8] sm:$0xff]
    %v826 = vld [vmem:[#allocation6 + $0x1c0] sm:$0xff]
    %v827 = vld [vmem:[#allocation6 + $0x1c8] sm:$0xff]
    %v828 = vld [vmem:[#allocation6 + $0x1d0] sm:$0xff]
    %v829 = vld [vmem:[#allocation6 + $0x1d8] sm:$0xff]
    %v830 = vld [vmem:[#allocation6 + $0x1e0] sm:$0xff]
    %v831 = vld [vmem:[#allocation6 + $0x1e8] sm:$0xff]
    %v832 = vld [vmem:[#allocation6 + $0x1f0] sm:$0xff]
    %v833 = vld [vmem:[#allocation6 + $0x1f8] sm:$0xff]
    %v834 = vld [vmem:[%s6] sm:$0x3]
    %v836 = vlaneseq
    %v837 = vshrl.u32 %v836, 7
    %v838 = vsub.s32 0, %v837
    %v839 = vrot.slane %v834, %v838
    %v840 = vlaneseq
    %v841 = vshrl.u32 %v840, 7
    %v842 = vsub.s32 1, %v841
    %v843 = vrot.slane %v834, %v842
    %v910 = vunpack.c.l.b16 %v770
    %v911 = vunpack.c.h.b16 %v770
    %v912 = vunpack.c.l.b16 %v771
    %v913 = vunpack.c.h.b16 %v771
    %v914 = vunpack.c.l.b16 %v772
    %v915 = vunpack.c.h.b16 %v772
    %v916 = vunpack.c.l.b16 %v773
    %v917 = vunpack.c.h.b16 %v773
    %v918 = vunpack.c.l.b16 %v774
    %v919 = vunpack.c.h.b16 %v774
    %v920 = vunpack.c.l.b16 %v775
    %v921 = vunpack.c.h.b16 %v775
    %v922 = vunpack.c.l.b16 %v776
    %v923 = vunpack.c.h.b16 %v776
    %v924 = vunpack.c.l.b16 %v777
    %v925 = vunpack.c.h.b16 %v777
    %v926 = vunpack.c.l.b16 %v778
    %v927 = vunpack.c.h.b16 %v778
    %v928 = vunpack.c.l.b16 %v779
    %v929 = vunpack.c.h.b16 %v779
    %v930 = vunpack.c.l.b16 %v780
    %v931 = vunpack.c.h.b16 %v780
    %v932 = vunpack.c.l.b16 %v781
    %v933 = vunpack.c.h.b16 %v781
    %v934 = vunpack.c.l.b16 %v782
    %v935 = vunpack.c.h.b16 %v782
    %v936 = vunpack.c.l.b16 %v783
    %v937 = vunpack.c.h.b16 %v783
    %v938 = vunpack.c.l.b16 %v784
    %v939 = vunpack.c.h.b16 %v784
    %v940 = vunpack.c.l.b16 %v785
    %v941 = vunpack.c.h.b16 %v785
    %v942 = vunpack.c.l.b16 %v786
    %v943 = vunpack.c.h.b16 %v786
    %v944 = vunpack.c.l.b16 %v787
    %v945 = vunpack.c.h.b16 %v787
    %v946 = vunpack.c.l.b16 %v788
    %v947 = vunpack.c.h.b16 %v788
    %v948 = vunpack.c.l.b16 %v789
    %v949 = vunpack.c.h.b16 %v789
    %v950 = vunpack.c.l.b16 %v790
    %v951 = vunpack.c.h.b16 %v790
    %v952 = vunpack.c.l.b16 %v791
    %v953 = vunpack.c.h.b16 %v791
    %v954 = vunpack.c.l.b16 %v792
    %v955 = vunpack.c.h.b16 %v792
    %v956 = vunpack.c.l.b16 %v793
    %v957 = vunpack.c.h.b16 %v793
    %v958 = vunpack.c.l.b16 %v794
    %v959 = vunpack.c.h.b16 %v794
    %v960 = vunpack.c.l.b16 %v795
    %v961 = vunpack.c.h.b16 %v795
    %v962 = vunpack.c.l.b16 %v796
    %v963 = vunpack.c.h.b16 %v796
    %v964 = vunpack.c.l.b16 %v797
    %v965 = vunpack.c.h.b16 %v797
    %v966 = vunpack.c.l.b16 %v798
    %v967 = vunpack.c.h.b16 %v798
    %v968 = vunpack.c.l.b16 %v799
    %v969 = vunpack.c.h.b16 %v799
    %v970 = vunpack.c.l.b16 %v800
    %v971 = vunpack.c.h.b16 %v800
    %v972 = vunpack.c.l.b16 %v801
    %v973 = vunpack.c.h.b16 %v801
    %v974 = vunpack.c.l.b16 %v802
    %v975 = vunpack.c.h.b16 %v802
    %v976 = vunpack.c.l.b16 %v803
    %v977 = vunpack.c.h.b16 %v803
    %v978 = vunpack.c.l.b16 %v804
    %v979 = vunpack.c.h.b16 %v804
    %v980 = vunpack.c.l.b16 %v805
    %v981 = vunpack.c.h.b16 %v805
    %v982 = vunpack.c.l.b16 %v806
    %v983 = vunpack.c.h.b16 %v806
    %v984 = vunpack.c.l.b16 %v807
    %v985 = vunpack.c.h.b16 %v807
    %v986 = vunpack.c.l.b16 %v808
    %v987 = vunpack.c.h.b16 %v808
    %v988 = vunpack.c.l.b16 %v809
    %v989 = vunpack.c.h.b16 %v809
    %v990 = vunpack.c.l.b16 %v810
    %v991 = vunpack.c.h.b16 %v810
    %v992 = vunpack.c.l.b16 %v811
    %v993 = vunpack.c.h.b16 %v811
    %v994 = vunpack.c.l.b16 %v812
    %v995 = vunpack.c.h.b16 %v812
    %v996 = vunpack.c.l.b16 %v813
    %v997 = vunpack.c.h.b16 %v813
    %v998 = vunpack.c.l.b16 %v814
    %v999 = vunpack.c.h.b16 %v814
    %v1000 = vunpack.c.l.b16 %v815
    %v1001 = vunpack.c.h.b16 %v815
    %v1002 = vunpack.c.l.b16 %v816
    %v1003 = vunpack.c.h.b16 %v816
    %v1004 = vunpack.c.l.b16 %v817
    %v1005 = vunpack.c.h.b16 %v817
    %v1006 = vunpack.c.l.b16 %v818
    %v1007 = vunpack.c.h.b16 %v818
    %v1008 = vunpack.c.l.b16 %v819
    %v1009 = vunpack.c.h.b16 %v819
    %v1010 = vunpack.c.l.b16 %v820
    %v1011 = vunpack.c.h.b16 %v820
    %v1012 = vunpack.c.l.b16 %v821
    %v1013 = vunpack.c.h.b16 %v821
    %v1014 = vunpack.c.l.b16 %v822
    %v1015 = vunpack.c.h.b16 %v822
    %v1016 = vunpack.c.l.b16 %v823
    %v1017 = vunpack.c.h.b16 %v823
    %v1018 = vunpack.c.l.b16 %v824
    %v1019 = vunpack.c.h.b16 %v824
    %v1020 = vunpack.c.l.b16 %v825
    %v1021 = vunpack.c.h.b16 %v825
    %v1022 = vunpack.c.l.b16 %v826
    %v1023 = vunpack.c.h.b16 %v826
    %v1024 = vunpack.c.l.b16 %v827
    %v1025 = vunpack.c.h.b16 %v827
    %v1026 = vunpack.c.l.b16 %v828
    %v1027 = vunpack.c.h.b16 %v828
    %v1028 = vunpack.c.l.b16 %v829
    %v1029 = vunpack.c.h.b16 %v829
    %v1030 = vunpack.c.l.b16 %v830
    %v1031 = vunpack.c.h.b16 %v830
    %v1032 = vunpack.c.l.b16 %v831
    %v1033 = vunpack.c.h.b16 %v831
    %v1034 = vunpack.c.l.b16 %v832
    %v1035 = vunpack.c.h.b16 %v832
    %v1036 = vunpack.c.l.b16 %v833
    %v1037 = vunpack.c.h.b16 %v833
    %v1038 = vpack.c.b16 %v912, %v910
    %v1039 = vpack.c.b16 %v913, %v911
    %v1040 = vpack.c.b16 %v916, %v914
    %v1041 = vpack.c.b16 %v917, %v915
    %v1042 = vpack.c.b16 %v920, %v918
    %v1043 = vpack.c.b16 %v921, %v919
    %v1044 = vpack.c.b16 %v924, %v922
    %v1045 = vpack.c.b16 %v925, %v923
    %v1046 = vpack.c.b16 %v928, %v926
    %v1047 = vpack.c.b16 %v929, %v927
    %v1048 = vpack.c.b16 %v932, %v930
    %v1049 = vpack.c.b16 %v933, %v931
    %v1050 = vpack.c.b16 %v936, %v934
    %v1051 = vpack.c.b16 %v937, %v935
    %v1052 = vpack.c.b16 %v940, %v938
    %v1053 = vpack.c.b16 %v941, %v939
    %v1054 = vpack.c.b16 %v944, %v942
    %v1055 = vpack.c.b16 %v945, %v943
    %v1056 = vpack.c.b16 %v948, %v946
    %v1057 = vpack.c.b16 %v949, %v947
    %v1058 = vpack.c.b16 %v952, %v950
    %v1059 = vpack.c.b16 %v953, %v951
    %v1060 = vpack.c.b16 %v956, %v954
    %v1061 = vpack.c.b16 %v957, %v955
    %v1062 = vpack.c.b16 %v960, %v958
    %v1063 = vpack.c.b16 %v961, %v959
    %v1064 = vpack.c.b16 %v964, %v962
    %v1065 = vpack.c.b16 %v965, %v963
    %v1066 = vpack.c.b16 %v968, %v966
    %v1067 = vpack.c.b16 %v969, %v967
    %v1068 = vpack.c.b16 %v972, %v970
    %v1069 = vpack.c.b16 %v973, %v971
    %v1070 = vpack.c.b16 %v976, %v974
    %v1071 = vpack.c.b16 %v977, %v975
    %v1072 = vpack.c.b16 %v980, %v978
    %v1073 = vpack.c.b16 %v981, %v979
    %v1074 = vpack.c.b16 %v984, %v982
    %v1075 = vpack.c.b16 %v985, %v983
    %v1076 = vpack.c.b16 %v988, %v986
    %v1077 = vpack.c.b16 %v989, %v987
    %v1078 = vpack.c.b16 %v992, %v990
    %v1079 = vpack.c.b16 %v993, %v991
    %v1080 = vpack.c.b16 %v996, %v994
    %v1081 = vpack.c.b16 %v997, %v995
    %v1082 = vpack.c.b16 %v1000, %v998
    %v1083 = vpack.c.b16 %v1001, %v999
    %v1084 = vpack.c.b16 %v1004, %v1002
    %v1085 = vpack.c.b16 %v1005, %v1003
    %v1086 = vpack.c.b16 %v1008, %v1006
    %v1087 = vpack.c.b16 %v1009, %v1007
    %v1088 = vpack.c.b16 %v1012, %v1010
    %v1089 = vpack.c.b16 %v1013, %v1011
    %v1090 = vpack.c.b16 %v1016, %v1014
    %v1091 = vpack.c.b16 %v1017, %v1015
    %v1092 = vpack.c.b16 %v1020, %v1018
    %v1093 = vpack.c.b16 %v1021, %v1019
    %v1094 = vpack.c.b16 %v1024, %v1022
    %v1095 = vpack.c.b16 %v1025, %v1023
    %v1096 = vpack.c.b16 %v1028, %v1026
    %v1097 = vpack.c.b16 %v1029, %v1027
    %v1098 = vpack.c.b16 %v1032, %v1030
    %v1099 = vpack.c.b16 %v1033, %v1031
    %v1100 = vpack.c.b16 %v1036, %v1034
    %v1101 = vpack.c.b16 %v1037, %v1035
    %1166 = vmatprep.subr.bf16.mxu0 %v1039
    %1167 = vmatpush1.bf16.msra.mxu0 %v1038
    %1168 = vmatprep.subr.bf16.mxu0 %v1041
    %1169 = vmatpush1.bf16.msra.mxu0 %v1040
    %1170 = vmatprep.subr.bf16.mxu0 %v1043
    %1171 = vmatpush1.bf16.msra.mxu0 %v1042
    %1172 = vmatprep.subr.bf16.mxu0 %v1045
    %1173 = vmatpush1.bf16.msra.mxu0 %v1044
    %1174 = vmatprep.subr.bf16.mxu0 %v1047
    %1175 = vmatpush1.bf16.msra.mxu0 %v1046
    %1176 = vmatprep.subr.bf16.mxu0 %v1049
    %1177 = vmatpush1.bf16.msra.mxu0 %v1048
    %1178 = vmatprep.subr.bf16.mxu0 %v1051
    %1179 = vmatpush1.bf16.msra.mxu0 %v1050
    %1180 = vmatprep.subr.bf16.mxu0 %v1053
    %1181 = vmatpush1.bf16.msra.mxu0 %v1052
    %1182 = vmatprep.subr.bf16.mxu0 %v1055
    %1183 = vmatpush1.bf16.msra.mxu0 %v1054
    %1184 = vmatprep.subr.bf16.mxu0 %v1057
    %1185 = vmatpush1.bf16.msra.mxu0 %v1056
    %1186 = vmatprep.subr.bf16.mxu0 %v1059
    %1187 = vmatpush1.bf16.msra.mxu0 %v1058
    %1188 = vmatprep.subr.bf16.mxu0 %v1061
    %1189 = vmatpush1.bf16.msra.mxu0 %v1060
    %1190 = vmatprep.subr.bf16.mxu0 %v1063
    %1191 = vmatpush1.bf16.msra.mxu0 %v1062
    %1192 = vmatprep.subr.bf16.mxu0 %v1065
    %1193 = vmatpush1.bf16.msra.mxu0 %v1064
    %1194 = vmatprep.subr.bf16.mxu0 %v1067
    %1195 = vmatpush1.bf16.msra.mxu0 %v1066
    %1196 = vmatprep.subr.bf16.mxu0 %v1069
    %1197 = vmatpush1.bf16.msra.mxu0 %v1068
    %1198 = vmatprep.mubr.bf16.mxu0 %v767
    %1199 = vmatmul.mubr.bf16.gmra.mrb[0].mxu0 %v766
    %v1200 = vpop.f32.mrb[0].mxu0
    %v1201 = vadd.f32 %v839, %v1200
    %v1202 = vpop.f32.mrb[0].mxu0
    %v1203 = vadd.f32 %v843, %v1202
    %v1204 = vpop.f32.mrb[0].mxu0
    %v1205 = vadd.f32 %v839, %v1204
    %v1206 = vpop.f32.mrb[0].mxu0
    %v1207 = vadd.f32 %v843, %v1206
    %1208 = vdwg.mxu0
    %1209 = vmatprep.subr.bf16.mxu0 %v1071
    %1210 = vmatpush1.bf16.msra.mxu0 %v1070
    %1211 = vmatprep.subr.bf16.mxu0 %v1073
    %1212 = vmatpush1.bf16.msra.mxu0 %v1072
    %1213 = vmatprep.subr.bf16.mxu0 %v1075
    %1214 = vmatpush1.bf16.msra.mxu0 %v1074
    %1215 = vmatprep.subr.bf16.mxu0 %v1077
    %1216 = vmatpush1.bf16.msra.mxu0 %v1076
    %1217 = vmatprep.subr.bf16.mxu0 %v1079
    %1218 = vmatpush1.bf16.msra.mxu0 %v1078
    %1219 = vmatprep.subr.bf16.mxu0 %v1081
    %1220 = vmatpush1.bf16.msra.mxu0 %v1080
    %1221 = vmatprep.subr.bf16.mxu0 %v1083
    %1222 = vmatpush1.bf16.msra.mxu0 %v1082
    %1223 = vmatprep.subr.bf16.mxu0 %v1085
    %1224 = vmatpush1.bf16.msra.mxu0 %v1084
    %1225 = vmatprep.subr.bf16.mxu0 %v1087
    %1226 = vmatpush1.bf16.msra.mxu0 %v1086
    %1227 = vmatprep.subr.bf16.mxu0 %v1089
    %1228 = vmatpush1.bf16.msra.mxu0 %v1088
    %1229 = vmatprep.subr.bf16.mxu0 %v1091
    %1230 = vmatpush1.bf16.msra.mxu0 %v1090
    %1231 = vmatprep.subr.bf16.mxu0 %v1093
    %1232 = vmatpush1.bf16.msra.mxu0 %v1092
    %1233 = vmatprep.subr.bf16.mxu0 %v1095
    %1234 = vmatpush1.bf16.msra.mxu0 %v1094
    %1235 = vmatprep.subr.bf16.mxu0 %v1097
    %1236 = vmatpush1.bf16.msra.mxu0 %v1096
    %1237 = vmatprep.subr.bf16.mxu0 %v1099
    %1238 = vmatpush1.bf16.msra.mxu0 %v1098
    %1239 = vmatprep.subr.bf16.mxu0 %v1101
    %1240 = vmatpush1.bf16.msra.mxu0 %v1100
    %1241 = vmatprep.mubr.bf16.mxu0 %v769
    %1242 = vmatmul.mubr.bf16.gmra.mrb[0].mxu0 %v768
    %v1243 = vpop.f32.mrb[0].mxu0
    %v1244 = vadd.f32 %v1201, %v1243
    %v1245 = vpop.f32.mrb[0].mxu0
    %v1246 = vadd.f32 %v1203, %v1245
    %v1247 = vpop.f32.mrb[0].mxu0
    %v1248 = vadd.f32 %v1205, %v1247
    %v1249 = vpop.f32.mrb[0].mxu0
    %v1250 = vadd.f32 %v1207, %v1249
    %1251 = vdwg.mxu0
    %v1252 = vmul.f32 %v1246, 1.442695
    %v1253 = vpow.pop %v1252
    %v1254 = vmul.f32 %v1250, 1.442695
    %v1255 = vpow.pop %v1254
    %v1256 = vld [vmem:[%s2] sm:$0xf]
    %v1257 = vld [vmem:[%s2 + $0x4] sm:$0xf]
    %v1258 = vunpack.c.l.bf16 %v1256
    %v1259 = vunpack.c.l.bf16 %v1257
    %v1260 = vmul.f32 %v1253, %v1258
    %v1261 = vmul.f32 %v1255, %v1259
    %v1262 = vadd.f32 %v1244, %v1260
    %v1263 = vadd.f32 %v1248, %v1261
    %v1264 = vmul.f32 %v1253, %v1253
    %v1265 = vmul.f32 %v1255, %v1255
    %v1266 = vmul.f32 %v1244, %v1244
    %v1267 = vmul.f32 %v1248, %v1248
    %v1268 = vadd.f32 %v1264, %v1266
    %v1269 = vadd.f32 %v1265, %v1267
    %v1270 = vsub.f32 %v1268, %v1246
    %v1271 = vsub.f32 %v1269, %v1250
    %v1272 = vsub.f32 %v1270, 0.5
    %v1273 = vsub.f32 %v1271, 0.5
    %1274 = vadd.xlane.f32.xlu0 %v1272
    %v1275 = vpop.xlane.xlu0 %1274
    %1276 = vadd.xlane.f32.xlu0 %v1273
    %v1277 = vpop.xlane.xlu0 %1276
    %v1278 = vsub.f32 %v1275, 56.0
    %v1279 = vsub.f32 %v1277, 56.0
    %vm1280 = vcmask 7168
    %1281 = vst.msk [vmem:[%s12] sm:$0xff] %vm1280, %v1278
    %1282 = vst.msk [vmem:[%s12 + $0x8] sm:$0xff] %vm1280, %v1279
    %v1283 = vpack.c.bf16 %v1263, %v1262
    %v1284 = vld [vmem:[#allocation8] sm:$0xff]
    %v1285 = vld [vmem:[#allocation8 + $0x8] sm:$0xff]
    %v1286 = vld [vmem:[#allocation8 + $0x10] sm:$0xff]
    %v1287 = vld [vmem:[#allocation8 + $0x18] sm:$0xff]
    %v1288 = vld [vmem:[#allocation8 + $0x20] sm:$0xff]
    %v1289 = vld [vmem:[#allocation8 + $0x28] sm:$0xff]
    %v1290 = vld [vmem:[#allocation8 + $0x30] sm:$0xff]
    %v1291 = vld [vmem:[#allocation8 + $0x38] sm:$0xff]
    %v1292 = vld [vmem:[#allocation8 + $0x40] sm:$0xff]
    %v1293 = vld [vmem:[#allocation8 + $0x48] sm:$0xff]
    %v1294 = vld [vmem:[#allocation8 + $0x50] sm:$0xff]
    %v1295 = vld [vmem:[#allocation8 + $0x58] sm:$0xff]
    %v1296 = vld [vmem:[#allocation8 + $0x60] sm:$0xff]
    %v1297 = vld [vmem:[#allocation8 + $0x68] sm:$0xff]
    %v1298 = vld [vmem:[#allocation8 + $0x70] sm:$0xff]
    %v1299 = vld [vmem:[#allocation8 + $0x78] sm:$0xff]
    %v1300 = vld [vmem:[#allocation8 + $0x80] sm:$0xff]
    %v1301 = vld [vmem:[#allocation8 + $0x88] sm:$0xff]
    %v1302 = vld [vmem:[#allocation8 + $0x90] sm:$0xff]
    %v1303 = vld [vmem:[#allocation8 + $0x98] sm:$0xff]
    %v1304 = vld [vmem:[#allocation8 + $0xa0] sm:$0xff]
    %v1305 = vld [vmem:[#allocation8 + $0xa8] sm:$0xff]
    %v1306 = vld [vmem:[#allocation8 + $0xb0] sm:$0xff]
    %v1307 = vld [vmem:[#allocation8 + $0xb8] sm:$0xff]
    %v1308 = vld [vmem:[#allocation8 + $0xc0] sm:$0xff]
    %v1309 = vld [vmem:[#allocation8 + $0xc8] sm:$0xff]
    %v1310 = vld [vmem:[#allocation8 + $0xd0] sm:$0xff]
    %v1311 = vld [vmem:[#allocation8 + $0xd8] sm:$0xff]
    %v1312 = vld [vmem:[#allocation8 + $0xe0] sm:$0xff]
    %v1313 = vld [vmem:[#allocation8 + $0xe8] sm:$0xff]
    %v1314 = vld [vmem:[#allocation8 + $0xf0] sm:$0xff]
    %v1315 = vld [vmem:[#allocation8 + $0xf8] sm:$0xff]
    %v1316 = vld [vmem:[%s8] sm:$0xf]
    %v1318 = vlaneseq
    %v1319 = vshrl.u32 %v1318, 7
    %v1320 = vsub.s32 0, %v1319
    %v1321 = vrot.slane %v1316, %v1320
    %v1322 = vlaneseq
    %v1323 = vshrl.u32 %v1322, 7
    %v1324 = vsub.s32 1, %v1323
    %v1325 = vrot.slane %v1316, %v1324
    %v1326 = vlaneseq
    %v1327 = vshrl.u32 %v1326, 7
    %v1328 = vsub.s32 2, %v1327
    %v1329 = vrot.slane %v1316, %v1328
    %v1330 = vlaneseq
    %v1331 = vshrl.u32 %v1330, 7
    %v1332 = vsub.s32 3, %v1331
    %v1333 = vrot.slane %v1316, %v1332
    %v1370 = vunpack.c.l.b16 %v1284
    %v1371 = vunpack.c.h.b16 %v1284
    %v1372 = vunpack.c.l.b16 %v1285
    %v1373 = vunpack.c.h.b16 %v1285
    %v1374 = vunpack.c.l.b16 %v1286
    %v1375 = vunpack.c.h.b16 %v1286
    %v1376 = vunpack.c.l.b16 %v1287
    %v1377 = vunpack.c.h.b16 %v1287
    %v1378 = vunpack.c.l.b16 %v1288
    %v1379 = vunpack.c.h.b16 %v1288
    %v1380 = vunpack.c.l.b16 %v1289
    %v1381 = vunpack.c.h.b16 %v1289
    %v1382 = vunpack.c.l.b16 %v1290
    %v1383 = vunpack.c.h.b16 %v1290
    %v1384 = vunpack.c.l.b16 %v1291
    %v1385 = vunpack.c.h.b16 %v1291
    %v1386 = vunpack.c.l.b16 %v1292
    %v1387 = vunpack.c.h.b16 %v1292
    %v1388 = vunpack.c.l.b16 %v1293
    %v1389 = vunpack.c.h.b16 %v1293
    %v1390 = vunpack.c.l.b16 %v1294
    %v1391 = vunpack.c.h.b16 %v1294
    %v1392 = vunpack.c.l.b16 %v1295
    %v1393 = vunpack.c.h.b16 %v1295
    %v1394 = vunpack.c.l.b16 %v1296
    %v1395 = vunpack.c.h.b16 %v1296
    %v1396 = vunpack.c.l.b16 %v1297
    %v1397 = vunpack.c.h.b16 %v1297
    %v1398 = vunpack.c.l.b16 %v1298
    %v1399 = vunpack.c.h.b16 %v1298
    %v1400 = vunpack.c.l.b16 %v1299
    %v1401 = vunpack.c.h.b16 %v1299
    %v1402 = vunpack.c.l.b16 %v1300
    %v1403 = vunpack.c.h.b16 %v1300
    %v1404 = vunpack.c.l.b16 %v1301
    %v1405 = vunpack.c.h.b16 %v1301
    %v1406 = vunpack.c.l.b16 %v1302
    %v1407 = vunpack.c.h.b16 %v1302
    %v1408 = vunpack.c.l.b16 %v1303
    %v1409 = vunpack.c.h.b16 %v1303
    %v1410 = vunpack.c.l.b16 %v1304
    %v1411 = vunpack.c.h.b16 %v1304
    %v1412 = vunpack.c.l.b16 %v1305
    %v1413 = vunpack.c.h.b16 %v1305
    %v1414 = vunpack.c.l.b16 %v1306
    %v1415 = vunpack.c.h.b16 %v1306
    %v1416 = vunpack.c.l.b16 %v1307
    %v1417 = vunpack.c.h.b16 %v1307
    %v1418 = vunpack.c.l.b16 %v1308
    %v1419 = vunpack.c.h.b16 %v1308
    %v1420 = vunpack.c.l.b16 %v1309
    %v1421 = vunpack.c.h.b16 %v1309
    %v1422 = vunpack.c.l.b16 %v1310
    %v1423 = vunpack.c.h.b16 %v1310
    %v1424 = vunpack.c.l.b16 %v1311
    %v1425 = vunpack.c.h.b16 %v1311
    %v1426 = vunpack.c.l.b16 %v1312
    %v1427 = vunpack.c.h.b16 %v1312
    %v1428 = vunpack.c.l.b16 %v1313
    %v1429 = vunpack.c.h.b16 %v1313
    %v1430 = vunpack.c.l.b16 %v1314
    %v1431 = vunpack.c.h.b16 %v1314
    %v1432 = vunpack.c.l.b16 %v1315
    %v1433 = vunpack.c.h.b16 %v1315
    %v1434 = vpack.c.b16 %v1374, %v1370
    %v1435 = vpack.c.b16 %v1375, %v1371
    %v1436 = vpack.c.b16 %v1376, %v1372
    %v1437 = vpack.c.b16 %v1377, %v1373
    %v1438 = vpack.c.b16 %v1382, %v1378
    %v1439 = vpack.c.b16 %v1383, %v1379
    %v1440 = vpack.c.b16 %v1384, %v1380
    %v1441 = vpack.c.b16 %v1385, %v1381
    %v1442 = vpack.c.b16 %v1390, %v1386
    %v1443 = vpack.c.b16 %v1391, %v1387
    %v1444 = vpack.c.b16 %v1392, %v1388
    %v1445 = vpack.c.b16 %v1393, %v1389
    %v1446 = vpack.c.b16 %v1398, %v1394
    %v1447 = vpack.c.b16 %v1399, %v1395
    %v1448 = vpack.c.b16 %v1400, %v1396
    %v1449 = vpack.c.b16 %v1401, %v1397
    %v1450 = vpack.c.b16 %v1406, %v1402
    %v1451 = vpack.c.b16 %v1407, %v1403
    %v1452 = vpack.c.b16 %v1408, %v1404
    %v1453 = vpack.c.b16 %v1409, %v1405
    %v1454 = vpack.c.b16 %v1414, %v1410
    %v1455 = vpack.c.b16 %v1415, %v1411
    %v1456 = vpack.c.b16 %v1416, %v1412
    %v1457 = vpack.c.b16 %v1417, %v1413
    %v1458 = vpack.c.b16 %v1422, %v1418
    %v1459 = vpack.c.b16 %v1423, %v1419
    %v1460 = vpack.c.b16 %v1424, %v1420
    %v1461 = vpack.c.b16 %v1425, %v1421
    %v1462 = vpack.c.b16 %v1430, %v1426
    %v1463 = vpack.c.b16 %v1431, %v1427
    %v1464 = vpack.c.b16 %v1432, %v1428
    %v1465 = vpack.c.b16 %v1433, %v1429
    %1498 = vmatprep.subr.bf16.mxu0 %v1435
    %1499 = vmatpush1.bf16.msra.mxu0 %v1434
    %1500 = vmatprep.subr.bf16.mxu0 %v1439
    %1501 = vmatpush1.bf16.msra.mxu0 %v1438
    %1502 = vmatprep.subr.bf16.mxu0 %v1443
    %1503 = vmatpush1.bf16.msra.mxu0 %v1442
    %1504 = vmatprep.subr.bf16.mxu0 %v1447
    %1505 = vmatpush1.bf16.msra.mxu0 %v1446
    %1506 = vmatprep.subr.bf16.mxu0 %v1451
    %1507 = vmatpush1.bf16.msra.mxu0 %v1450
    %1508 = vmatprep.subr.bf16.mxu0 %v1455
    %1509 = vmatpush1.bf16.msra.mxu0 %v1454
    %1510 = vmatprep.subr.bf16.mxu0 %v1459
    %1511 = vmatpush1.bf16.msra.mxu0 %v1458
    %1512 = vmatprep.subr.bf16.mxu0 %v1463
    %1513 = vmatpush1.bf16.msra.mxu0 %v1462
    %1514 = vmatprep.subr.bf16.mxu0 0
    %1515 = vmatpush1.bf16.msra.mxu0 0
    %1516 = vmatprep.subr.bf16.mxu0 0
    %1517 = vmatpush1.bf16.msra.mxu0 0
    %1518 = vmatprep.subr.bf16.mxu0 0
    %1519 = vmatpush1.bf16.msra.mxu0 0
    %1520 = vmatprep.subr.bf16.mxu0 0
    %1521 = vmatpush1.bf16.msra.mxu0 0
    %1522 = vmatprep.subr.bf16.mxu0 0
    %1523 = vmatpush1.bf16.msra.mxu0 0
    %1524 = vmatprep.subr.bf16.mxu0 0
    %1525 = vmatpush1.bf16.msra.mxu0 0
    %1526 = vmatprep.subr.bf16.mxu0 0
    %1527 = vmatpush1.bf16.msra.mxu0 0
    %1528 = vmatprep.subr.bf16.mxu0 0
    %1529 = vmatpush1.bf16.msra.mxu0 0
    %1530 = vmatprep.mubr.bf16.mxu0 0
    %1531 = vmatmul.mubr.bf16.gmra.mrb[0].mxu0 %v1283
    %v1532 = vpop.f32.mrb[0].mxu0
    %v1533 = vadd.f32 %v1321, %v1532
    %v1534 = vpop.f32.mrb[0].mxu0
    %v1535 = vadd.f32 %v1325, %v1534
    %v1536 = vpop.f32.mrb[0].mxu0
    %v1537 = vadd.f32 %v1321, %v1536
    %v1538 = vpop.f32.mrb[0].mxu0
    %v1539 = vadd.f32 %v1325, %v1538
    %1540 = vdwg.mxu0
    %1541 = vmatprep.subr.bf16.mxu0 %v1437
    %1542 = vmatpush1.bf16.msra.mxu0 %v1436
    %1543 = vmatprep.subr.bf16.mxu0 %v1441
    %1544 = vmatpush1.bf16.msra.mxu0 %v1440
    %1545 = vmatprep.subr.bf16.mxu0 %v1445
    %1546 = vmatpush1.bf16.msra.mxu0 %v1444
    %1547 = vmatprep.subr.bf16.mxu0 %v1449
    %1548 = vmatpush1.bf16.msra.mxu0 %v1448
    %1549 = vmatprep.subr.bf16.mxu0 %v1453
    %1550 = vmatpush1.bf16.msra.mxu0 %v1452
    %1551 = vmatprep.subr.bf16.mxu0 %v1457
    %1552 = vmatpush1.bf16.msra.mxu0 %v1456
    %1553 = vmatprep.subr.bf16.mxu0 %v1461
    %1554 = vmatpush1.bf16.msra.mxu0 %v1460
    %1555 = vmatprep.subr.bf16.mxu0 %v1465
    %1556 = vmatpush1.bf16.msra.mxu0 %v1464
    %1557 = vmatprep.subr.bf16.mxu0 0
    %1558 = vmatpush1.bf16.msra.mxu0 0
    %1559 = vmatprep.subr.bf16.mxu0 0
    %1560 = vmatpush1.bf16.msra.mxu0 0
    %1561 = vmatprep.subr.bf16.mxu0 0
    %1562 = vmatpush1.bf16.msra.mxu0 0
    %1563 = vmatprep.subr.bf16.mxu0 0
    %1564 = vmatpush1.bf16.msra.mxu0 0
    %1565 = vmatprep.subr.bf16.mxu0 0
    %1566 = vmatpush1.bf16.msra.mxu0 0
    %1567 = vmatprep.subr.bf16.mxu0 0
    %1568 = vmatpush1.bf16.msra.mxu0 0
    %1569 = vmatprep.subr.bf16.mxu0 0
    %1570 = vmatpush1.bf16.msra.mxu0 0
    %1571 = vmatprep.subr.bf16.mxu0 0
    %1572 = vmatpush1.bf16.msra.mxu0 0
    %1573 = vmatprep.mubr.bf16.mxu0 0
    %1574 = vmatmul.mubr.bf16.gmra.mrb[0].mxu0 %v1283
    %v1575 = vpop.f32.mrb[0].mxu0
    %v1576 = vadd.f32 %v1329, %v1575
    %v1577 = vpop.f32.mrb[0].mxu0
    %v1578 = vadd.f32 %v1333, %v1577
    %v1579 = vpop.f32.mrb[0].mxu0
    %v1580 = vadd.f32 %v1329, %v1579
    %v1581 = vpop.f32.mrb[0].mxu0
    %v1582 = vadd.f32 %v1333, %v1581
    %1583 = vdwg.mxu0
    %v1584 = vmax.f32 %v1533, 0.0
    %v1585 = vmax.f32 %v1535, 0.0
    %v1586 = vmax.f32 %v1576, 0.0
    %v1587 = vmax.f32 %v1578, 0.0
    %v1588 = vmax.f32 %v1537, 0.0
    %v1589 = vmax.f32 %v1539, 0.0
    %v1590 = vmax.f32 %v1580, 0.0
    %v1591 = vmax.f32 %v1582, 0.0
    %v1592 = vstv %s98
    %v1593 = vxor.u32 %v621, %v1592
    %v1594 = vxor.u32 %v622, %v1592
    %v1595 = vxor.u32 %v623, %v1592
    %v1596 = vxor.u32 %v624, %v1592
    %v1597 = vxor.u32 %v625, %v1592
    %v1598 = vxor.u32 %v626, %v1592
    %v1599 = vxor.u32 %v627, %v1592
    %v1600 = vxor.u32 %v628, %v1592
    %v1601 = vshll.u32 %v1593, 13
    %v1602 = vshll.u32 %v1594, 13
    %v1603 = vshll.u32 %v1595, 13
    %v1604 = vshll.u32 %v1596, 13
    %v1605 = vshll.u32 %v1597, 13
    %v1606 = vshll.u32 %v1598, 13
    %v1607 = vshll.u32 %v1599, 13
    %v1608 = vshll.u32 %v1600, 13
    %v1609 = vxor.u32 %v1593, %v1601
    %v1610 = vxor.u32 %v1594, %v1602
    %v1611 = vxor.u32 %v1595, %v1603
    %v1612 = vxor.u32 %v1596, %v1604
    %v1613 = vxor.u32 %v1597, %v1605
    %v1614 = vxor.u32 %v1598, %v1606
    %v1615 = vxor.u32 %v1599, %v1607
    %v1616 = vxor.u32 %v1600, %v1608
    %v1617 = vshrl.u32 %v1609, 17
    %v1618 = vshrl.u32 %v1610, 17
    %v1619 = vshrl.u32 %v1611, 17
    %v1620 = vshrl.u32 %v1612, 17
    %v1621 = vshrl.u32 %v1613, 17
    %v1622 = vshrl.u32 %v1614, 17
    %v1623 = vshrl.u32 %v1615, 17
    %v1624 = vshrl.u32 %v1616, 17
    %v1625 = vxor.u32 %v1609, %v1617
    %v1626 = vxor.u32 %v1610, %v1618
    %v1627 = vxor.u32 %v1611, %v1619
    %v1628 = vxor.u32 %v1612, %v1620
    %v1629 = vxor.u32 %v1613, %v1621
    %v1630 = vxor.u32 %v1614, %v1622
    %v1631 = vxor.u32 %v1615, %v1623
    %v1632 = vxor.u32 %v1616, %v1624
    %v1633 = vshll.u32 %v1625, 5
    %v1634 = vshll.u32 %v1626, 5
    %v1635 = vshll.u32 %v1627, 5
    %v1636 = vshll.u32 %v1628, 5
    %v1637 = vshll.u32 %v1629, 5
    %v1638 = vshll.u32 %v1630, 5
    %v1639 = vshll.u32 %v1631, 5
    %v1640 = vshll.u32 %v1632, 5
    %v1641 = vxor.u32 %v1625, %v1633
    %v1642 = vxor.u32 %v1626, %v1634
    %v1643 = vxor.u32 %v1627, %v1635
    %v1644 = vxor.u32 %v1628, %v1636
    %v1645 = vxor.u32 %v1629, %v1637
    %v1646 = vxor.u32 %v1630, %v1638
    %v1647 = vxor.u32 %v1631, %v1639
    %v1648 = vxor.u32 %v1632, %v1640
    %v1649 = vadd.s32 %v1641, 1013904223
    %v1650 = vadd.s32 %v1642, 1013904223
    %v1651 = vadd.s32 %v1643, 1013904223
    %v1652 = vadd.s32 %v1644, 1013904223
    %v1653 = vadd.s32 %v1645, 1013904223
    %v1654 = vadd.s32 %v1646, 1013904223
    %v1655 = vadd.s32 %v1647, 1013904223
    %v1656 = vadd.s32 %v1648, 1013904223
    %v1657 = vshll.u32 %v1649, 13
    %v1658 = vshll.u32 %v1650, 13
    %v1659 = vshll.u32 %v1651, 13
    %v1660 = vshll.u32 %v1652, 13
    %v1661 = vshll.u32 %v1653, 13
    %v1662 = vshll.u32 %v1654, 13
    %v1663 = vshll.u32 %v1655, 13
    %v1664 = vshll.u32 %v1656, 13
    %v1665 = vxor.u32 %v1649, %v1657
    %v1666 = vxor.u32 %v1650, %v1658
    %v1667 = vxor.u32 %v1651, %v1659
    %v1668 = vxor.u32 %v1652, %v1660
    %v1669 = vxor.u32 %v1653, %v1661
    %v1670 = vxor.u32 %v1654, %v1662
    %v1671 = vxor.u32 %v1655, %v1663
    %v1672 = vxor.u32 %v1656, %v1664
    %v1673 = vshrl.u32 %v1665, 17
    %v1674 = vshrl.u32 %v1666, 17
    %v1675 = vshrl.u32 %v1667, 17
    %v1676 = vshrl.u32 %v1668, 17
    %v1677 = vshrl.u32 %v1669, 17
    %v1678 = vshrl.u32 %v1670, 17
    %v1679 = vshrl.u32 %v1671, 17
    %v1680 = vshrl.u32 %v1672, 17
    %v1681 = vxor.u32 %v1665, %v1673
    %v1682 = vxor.u32 %v1666, %v1674
    %v1683 = vxor.u32 %v1667, %v1675
    %v1684 = vxor.u32 %v1668, %v1676
    %v1685 = vxor.u32 %v1669, %v1677
    %v1686 = vxor.u32 %v1670, %v1678
    %v1687 = vxor.u32 %v1671, %v1679
    %v1688 = vxor.u32 %v1672, %v1680
    %v1689 = vshll.u32 %v1681, 5
    %v1690 = vshll.u32 %v1682, 5
    %v1691 = vshll.u32 %v1683, 5
    %v1692 = vshll.u32 %v1684, 5
    %v1693 = vshll.u32 %v1685, 5
    %v1694 = vshll.u32 %v1686, 5
    %v1695 = vshll.u32 %v1687, 5
    %v1696 = vshll.u32 %v1688, 5
    %v1697 = vxor.u32 %v1681, %v1689
    %v1698 = vxor.u32 %v1682, %v1690
    %v1699 = vxor.u32 %v1683, %v1691
    %v1700 = vxor.u32 %v1684, %v1692
    %v1701 = vxor.u32 %v1685, %v1693
    %v1702 = vxor.u32 %v1686, %v1694
    %v1703 = vxor.u32 %v1687, %v1695
    %v1704 = vxor.u32 %v1688, %v1696
    %v1705 = vand.u32 %v1697, 2147483647
    %v1706 = vand.u32 %v1698, 2147483647
    %v1707 = vand.u32 %v1699, 2147483647
    %v1708 = vand.u32 %v1700, 2147483647
    %v1709 = vand.u32 %v1701, 2147483647
    %v1710 = vand.u32 %v1702, 2147483647
    %v1711 = vand.u32 %v1703, 2147483647
    %v1712 = vand.u32 %v1704, 2147483647
    %vm1713 = vcmp.lt.s32.totalorder %v1705, 1825361100
    %vm1714 = vcmp.lt.s32.totalorder %v1706, 1825361100
    %vm1715 = vcmp.lt.s32.totalorder %v1707, 1825361100
    %vm1716 = vcmp.lt.s32.totalorder %v1708, 1825361100
    %vm1717 = vcmp.lt.s32.totalorder %v1709, 1825361100
    %vm1718 = vcmp.lt.s32.totalorder %v1710, 1825361100
    %vm1719 = vcmp.lt.s32.totalorder %v1711, 1825361100
    %vm1720 = vcmp.lt.s32.totalorder %v1712, 1825361100
    %v1721 = vsel %vm1713, %v1584, 0.0
    %v1722 = vsel %vm1714, %v1585, 0.0
    %v1723 = vsel %vm1715, %v1586, 0.0
    %v1724 = vsel %vm1716, %v1587, 0.0
    %v1725 = vsel %vm1717, %v1588, 0.0
    %v1726 = vsel %vm1718, %v1589, 0.0
    %v1727 = vsel %vm1719, %v1590, 0.0
    %v1728 = vsel %vm1720, %v1591, 0.0
    %v1729 = vpack.c.bf16 %v1725, %v1721
    %v1730 = vpack.c.bf16 %v1726, %v1722
    %v1731 = vpack.c.bf16 %v1727, %v1723
    %v1732 = vpack.c.bf16 %v1728, %v1724
    %v1733 = vld [vmem:[#allocation9] sm:$0xff]
    %v1734 = vld [vmem:[#allocation9 + $0x8] sm:$0xff]
    %v1735 = vld [vmem:[#allocation9 + $0x10] sm:$0xff]
    %v1736 = vld [vmem:[#allocation9 + $0x18] sm:$0xff]
    %v1737 = vld [vmem:[#allocation9 + $0x20] sm:$0xff]
    %v1738 = vld [vmem:[#allocation9 + $0x28] sm:$0xff]
    %v1739 = vld [vmem:[#allocation9 + $0x30] sm:$0xff]
    %v1740 = vld [vmem:[#allocation9 + $0x38] sm:$0xff]
    %v1741 = vld [vmem:[#allocation9 + $0x40] sm:$0xff]
    %v1742 = vld [vmem:[#allocation9 + $0x48] sm:$0xff]
    %v1743 = vld [vmem:[#allocation9 + $0x50] sm:$0xff]
    %v1744 = vld [vmem:[#allocation9 + $0x58] sm:$0xff]
    %v1745 = vld [vmem:[#allocation9 + $0x60] sm:$0xff]
    %v1746 = vld [vmem:[#allocation9 + $0x68] sm:$0xff]
    %v1747 = vld [vmem:[#allocation9 + $0x70] sm:$0xff]
    %v1748 = vld [vmem:[#allocation9 + $0x78] sm:$0xff]
    %v1749 = vld [vmem:[#allocation9 + $0x80] sm:$0xff]
    %v1750 = vld [vmem:[#allocation9 + $0x88] sm:$0xff]
    %v1751 = vld [vmem:[#allocation9 + $0x90] sm:$0xff]
    %v1752 = vld [vmem:[#allocation9 + $0x98] sm:$0xff]
    %v1753 = vld [vmem:[#allocation9 + $0xa0] sm:$0xff]
    %v1754 = vld [vmem:[#allocation9 + $0xa8] sm:$0xff]
    %v1755 = vld [vmem:[#allocation9 + $0xb0] sm:$0xff]
    %v1756 = vld [vmem:[#allocation9 + $0xb8] sm:$0xff]
    %v1757 = vld [vmem:[#allocation9 + $0xc0] sm:$0xff]
    %v1758 = vld [vmem:[#allocation9 + $0xc8] sm:$0xff]
    %v1759 = vld [vmem:[#allocation9 + $0xd0] sm:$0xff]
    %v1760 = vld [vmem:[#allocation9 + $0xd8] sm:$0xff]
    %v1761 = vld [vmem:[#allocation9 + $0xe0] sm:$0xff]
    %v1762 = vld [vmem:[#allocation9 + $0xe8] sm:$0xff]
    %v1763 = vld [vmem:[#allocation9 + $0xf0] sm:$0xff]
    %v1764 = vld [vmem:[#allocation9 + $0xf8] sm:$0xff]
    %v1765 = vld [vmem:[#allocation9 + $0x100] sm:$0xff]
    %v1766 = vld [vmem:[#allocation9 + $0x108] sm:$0xff]
    %v1767 = vld [vmem:[#allocation9 + $0x110] sm:$0xff]
    %v1768 = vld [vmem:[#allocation9 + $0x118] sm:$0xff]
    %v1769 = vld [vmem:[#allocation9 + $0x120] sm:$0xff]
    %v1770 = vld [vmem:[#allocation9 + $0x128] sm:$0xff]
    %v1771 = vld [vmem:[#allocation9 + $0x130] sm:$0xff]
    %v1772 = vld [vmem:[#allocation9 + $0x138] sm:$0xff]
    %v1773 = vld [vmem:[#allocation9 + $0x140] sm:$0xff]
    %v1774 = vld [vmem:[#allocation9 + $0x148] sm:$0xff]
    %v1775 = vld [vmem:[#allocation9 + $0x150] sm:$0xff]
    %v1776 = vld [vmem:[#allocation9 + $0x158] sm:$0xff]
    %v1777 = vld [vmem:[#allocation9 + $0x160] sm:$0xff]
    %v1778 = vld [vmem:[#allocation9 + $0x168] sm:$0xff]
    %v1779 = vld [vmem:[#allocation9 + $0x170] sm:$0xff]
    %v1780 = vld [vmem:[#allocation9 + $0x178] sm:$0xff]
    %v1781 = vld [vmem:[#allocation9 + $0x180] sm:$0xff]
    %v1782 = vld [vmem:[#allocation9 + $0x188] sm:$0xff]
    %v1783 = vld [vmem:[#allocation9 + $0x190] sm:$0xff]
    %v1784 = vld [vmem:[#allocation9 + $0x198] sm:$0xff]
    %v1785 = vld [vmem:[#allocation9 + $0x1a0] sm:$0xff]
    %v1786 = vld [vmem:[#allocation9 + $0x1a8] sm:$0xff]
    %v1787 = vld [vmem:[#allocation9 + $0x1b0] sm:$0xff]
    %v1788 = vld [vmem:[#allocation9 + $0x1b8] sm:$0xff]
    %v1789 = vld [vmem:[#allocation9 + $0x1c0] sm:$0xff]
    %v1790 = vld [vmem:[#allocation9 + $0x1c8] sm:$0xff]
    %v1791 = vld [vmem:[#allocation9 + $0x1d0] sm:$0xff]
    %v1792 = vld [vmem:[#allocation9 + $0x1d8] sm:$0xff]
    %v1793 = vld [vmem:[#allocation9 + $0x1e0] sm:$0xff]
    %v1794 = vld [vmem:[#allocation9 + $0x1e8] sm:$0xff]
    %v1795 = vld [vmem:[#allocation9 + $0x1f0] sm:$0xff]
    %v1796 = vld [vmem:[#allocation9 + $0x1f8] sm:$0xff]
    %v1797 = vld [vmem:[%s10] sm:$0x3]
    %v1799 = vlaneseq
    %v1800 = vshrl.u32 %v1799, 7
    %v1801 = vsub.s32 0, %v1800
    %v1802 = vrot.slane %v1797, %v1801
    %v1803 = vlaneseq
    %v1804 = vshrl.u32 %v1803, 7
    %v1805 = vsub.s32 1, %v1804
    %v1806 = vrot.slane %v1797, %v1805
    %v1873 = vunpack.c.l.b16 %v1733
    %v1874 = vunpack.c.h.b16 %v1733
    %v1875 = vunpack.c.l.b16 %v1734
    %v1876 = vunpack.c.h.b16 %v1734
    %v1877 = vunpack.c.l.b16 %v1735
    %v1878 = vunpack.c.h.b16 %v1735
    %v1879 = vunpack.c.l.b16 %v1736
    %v1880 = vunpack.c.h.b16 %v1736
    %v1881 = vunpack.c.l.b16 %v1737
    %v1882 = vunpack.c.h.b16 %v1737
    %v1883 = vunpack.c.l.b16 %v1738
    %v1884 = vunpack.c.h.b16 %v1738
    %v1885 = vunpack.c.l.b16 %v1739
    %v1886 = vunpack.c.h.b16 %v1739
    %v1887 = vunpack.c.l.b16 %v1740
    %v1888 = vunpack.c.h.b16 %v1740
    %v1889 = vunpack.c.l.b16 %v1741
    %v1890 = vunpack.c.h.b16 %v1741
    %v1891 = vunpack.c.l.b16 %v1742
    %v1892 = vunpack.c.h.b16 %v1742
    %v1893 = vunpack.c.l.b16 %v1743
    %v1894 = vunpack.c.h.b16 %v1743
    %v1895 = vunpack.c.l.b16 %v1744
    %v1896 = vunpack.c.h.b16 %v1744
    %v1897 = vunpack.c.l.b16 %v1745
    %v1898 = vunpack.c.h.b16 %v1745
    %v1899 = vunpack.c.l.b16 %v1746
    %v1900 = vunpack.c.h.b16 %v1746
    %v1901 = vunpack.c.l.b16 %v1747
    %v1902 = vunpack.c.h.b16 %v1747
    %v1903 = vunpack.c.l.b16 %v1748
    %v1904 = vunpack.c.h.b16 %v1748
    %v1905 = vunpack.c.l.b16 %v1749
    %v1906 = vunpack.c.h.b16 %v1749
    %v1907 = vunpack.c.l.b16 %v1750
    %v1908 = vunpack.c.h.b16 %v1750
    %v1909 = vunpack.c.l.b16 %v1751
    %v1910 = vunpack.c.h.b16 %v1751
    %v1911 = vunpack.c.l.b16 %v1752
    %v1912 = vunpack.c.h.b16 %v1752
    %v1913 = vunpack.c.l.b16 %v1753
    %v1914 = vunpack.c.h.b16 %v1753
    %v1915 = vunpack.c.l.b16 %v1754
    %v1916 = vunpack.c.h.b16 %v1754
    %v1917 = vunpack.c.l.b16 %v1755
    %v1918 = vunpack.c.h.b16 %v1755
    %v1919 = vunpack.c.l.b16 %v1756
    %v1920 = vunpack.c.h.b16 %v1756
    %v1921 = vunpack.c.l.b16 %v1757
    %v1922 = vunpack.c.h.b16 %v1757
    %v1923 = vunpack.c.l.b16 %v1758
    %v1924 = vunpack.c.h.b16 %v1758
    %v1925 = vunpack.c.l.b16 %v1759
    %v1926 = vunpack.c.h.b16 %v1759
    %v1927 = vunpack.c.l.b16 %v1760
    %v1928 = vunpack.c.h.b16 %v1760
    %v1929 = vunpack.c.l.b16 %v1761
    %v1930 = vunpack.c.h.b16 %v1761
    %v1931 = vunpack.c.l.b16 %v1762
    %v1932 = vunpack.c.h.b16 %v1762
    %v1933 = vunpack.c.l.b16 %v1763
    %v1934 = vunpack.c.h.b16 %v1763
    %v1935 = vunpack.c.l.b16 %v1764
    %v1936 = vunpack.c.h.b16 %v1764
    %v1937 = vunpack.c.l.b16 %v1765
    %v1938 = vunpack.c.h.b16 %v1765
    %v1939 = vunpack.c.l.b16 %v1766
    %v1940 = vunpack.c.h.b16 %v1766
    %v1941 = vunpack.c.l.b16 %v1767
    %v1942 = vunpack.c.h.b16 %v1767
    %v1943 = vunpack.c.l.b16 %v1768
    %v1944 = vunpack.c.h.b16 %v1768
    %v1945 = vunpack.c.l.b16 %v1769
    %v1946 = vunpack.c.h.b16 %v1769
    %v1947 = vunpack.c.l.b16 %v1770
    %v1948 = vunpack.c.h.b16 %v1770
    %v1949 = vunpack.c.l.b16 %v1771
    %v1950 = vunpack.c.h.b16 %v1771
    %v1951 = vunpack.c.l.b16 %v1772
    %v1952 = vunpack.c.h.b16 %v1772
    %v1953 = vunpack.c.l.b16 %v1773
    %v1954 = vunpack.c.h.b16 %v1773
    %v1955 = vunpack.c.l.b16 %v1774
    %v1956 = vunpack.c.h.b16 %v1774
    %v1957 = vunpack.c.l.b16 %v1775
    %v1958 = vunpack.c.h.b16 %v1775
    %v1959 = vunpack.c.l.b16 %v1776
    %v1960 = vunpack.c.h.b16 %v1776
    %v1961 = vunpack.c.l.b16 %v1777
    %v1962 = vunpack.c.h.b16 %v1777
    %v1963 = vunpack.c.l.b16 %v1778
    %v1964 = vunpack.c.h.b16 %v1778
    %v1965 = vunpack.c.l.b16 %v1779
    %v1966 = vunpack.c.h.b16 %v1779
    %v1967 = vunpack.c.l.b16 %v1780
    %v1968 = vunpack.c.h.b16 %v1780
    %v1969 = vunpack.c.l.b16 %v1781
    %v1970 = vunpack.c.h.b16 %v1781
    %v1971 = vunpack.c.l.b16 %v1782
    %v1972 = vunpack.c.h.b16 %v1782
    %v1973 = vunpack.c.l.b16 %v1783
    %v1974 = vunpack.c.h.b16 %v1783
    %v1975 = vunpack.c.l.b16 %v1784
    %v1976 = vunpack.c.h.b16 %v1784
    %v1977 = vunpack.c.l.b16 %v1785
    %v1978 = vunpack.c.h.b16 %v1785
    %v1979 = vunpack.c.l.b16 %v1786
    %v1980 = vunpack.c.h.b16 %v1786
    %v1981 = vunpack.c.l.b16 %v1787
    %v1982 = vunpack.c.h.b16 %v1787
    %v1983 = vunpack.c.l.b16 %v1788
    %v1984 = vunpack.c.h.b16 %v1788
    %v1985 = vunpack.c.l.b16 %v1789
    %v1986 = vunpack.c.h.b16 %v1789
    %v1987 = vunpack.c.l.b16 %v1790
    %v1988 = vunpack.c.h.b16 %v1790
    %v1989 = vunpack.c.l.b16 %v1791
    %v1990 = vunpack.c.h.b16 %v1791
    %v1991 = vunpack.c.l.b16 %v1792
    %v1992 = vunpack.c.h.b16 %v1792
    %v1993 = vunpack.c.l.b16 %v1793
    %v1994 = vunpack.c.h.b16 %v1793
    %v1995 = vunpack.c.l.b16 %v1794
    %v1996 = vunpack.c.h.b16 %v1794
    %v1997 = vunpack.c.l.b16 %v1795
    %v1998 = vunpack.c.h.b16 %v1795
    %v1999 = vunpack.c.l.b16 %v1796
    %v2000 = vunpack.c.h.b16 %v1796
    %v2001 = vpack.c.b16 %v1875, %v1873
    %v2002 = vpack.c.b16 %v1876, %v1874
    %v2003 = vpack.c.b16 %v1879, %v1877
    %v2004 = vpack.c.b16 %v1880, %v1878
    %v2005 = vpack.c.b16 %v1883, %v1881
    %v2006 = vpack.c.b16 %v1884, %v1882
    %v2007 = vpack.c.b16 %v1887, %v1885
    %v2008 = vpack.c.b16 %v1888, %v1886
    %v2009 = vpack.c.b16 %v1891, %v1889
    %v2010 = vpack.c.b16 %v1892, %v1890
    %v2011 = vpack.c.b16 %v1895, %v1893
    %v2012 = vpack.c.b16 %v1896, %v1894
    %v2013 = vpack.c.b16 %v1899, %v1897
    %v2014 = vpack.c.b16 %v1900, %v1898
    %v2015 = vpack.c.b16 %v1903, %v1901
    %v2016 = vpack.c.b16 %v1904, %v1902
    %v2017 = vpack.c.b16 %v1907, %v1905
    %v2018 = vpack.c.b16 %v1908, %v1906
    %v2019 = vpack.c.b16 %v1911, %v1909
    %v2020 = vpack.c.b16 %v1912, %v1910
    %v2021 = vpack.c.b16 %v1915, %v1913
    %v2022 = vpack.c.b16 %v1916, %v1914
    %v2023 = vpack.c.b16 %v1919, %v1917
    %v2024 = vpack.c.b16 %v1920, %v1918
    %v2025 = vpack.c.b16 %v1923, %v1921
    %v2026 = vpack.c.b16 %v1924, %v1922
    %v2027 = vpack.c.b16 %v1927, %v1925
    %v2028 = vpack.c.b16 %v1928, %v1926
    %v2029 = vpack.c.b16 %v1931, %v1929
    %v2030 = vpack.c.b16 %v1932, %v1930
    %v2031 = vpack.c.b16 %v1935, %v1933
    %v2032 = vpack.c.b16 %v1936, %v1934
    %v2033 = vpack.c.b16 %v1939, %v1937
    %v2034 = vpack.c.b16 %v1940, %v1938
    %v2035 = vpack.c.b16 %v1943, %v1941
    %v2036 = vpack.c.b16 %v1944, %v1942
    %v2037 = vpack.c.b16 %v1947, %v1945
    %v2038 = vpack.c.b16 %v1948, %v1946
    %v2039 = vpack.c.b16 %v1951, %v1949
    %v2040 = vpack.c.b16 %v1952, %v1950
    %v2041 = vpack.c.b16 %v1955, %v1953
    %v2042 = vpack.c.b16 %v1956, %v1954
    %v2043 = vpack.c.b16 %v1959, %v1957
    %v2044 = vpack.c.b16 %v1960, %v1958
    %v2045 = vpack.c.b16 %v1963, %v1961
    %v2046 = vpack.c.b16 %v1964, %v1962
    %v2047 = vpack.c.b16 %v1967, %v1965
    %v2048 = vpack.c.b16 %v1968, %v1966
    %v2049 = vpack.c.b16 %v1971, %v1969
    %v2050 = vpack.c.b16 %v1972, %v1970
    %v2051 = vpack.c.b16 %v1975, %v1973
    %v2052 = vpack.c.b16 %v1976, %v1974
    %v2053 = vpack.c.b16 %v1979, %v1977
    %v2054 = vpack.c.b16 %v1980, %v1978
    %v2055 = vpack.c.b16 %v1983, %v1981
    %v2056 = vpack.c.b16 %v1984, %v1982
    %v2057 = vpack.c.b16 %v1987, %v1985
    %v2058 = vpack.c.b16 %v1988, %v1986
    %v2059 = vpack.c.b16 %v1991, %v1989
    %v2060 = vpack.c.b16 %v1992, %v1990
    %v2061 = vpack.c.b16 %v1995, %v1993
    %v2062 = vpack.c.b16 %v1996, %v1994
    %v2063 = vpack.c.b16 %v1999, %v1997
    %v2064 = vpack.c.b16 %v2000, %v1998
    %2129 = vmatprep.subr.bf16.mxu0 %v2002
    %2130 = vmatpush1.bf16.msra.mxu0 %v2001
    %2131 = vmatprep.subr.bf16.mxu0 %v2004
    %2132 = vmatpush1.bf16.msra.mxu0 %v2003
    %2133 = vmatprep.subr.bf16.mxu0 %v2006
    %2134 = vmatpush1.bf16.msra.mxu0 %v2005
    %2135 = vmatprep.subr.bf16.mxu0 %v2008
    %2136 = vmatpush1.bf16.msra.mxu0 %v2007
    %2137 = vmatprep.subr.bf16.mxu0 %v2010
    %2138 = vmatpush1.bf16.msra.mxu0 %v2009
    %2139 = vmatprep.subr.bf16.mxu0 %v2012
    %2140 = vmatpush1.bf16.msra.mxu0 %v2011
    %2141 = vmatprep.subr.bf16.mxu0 %v2014
    %2142 = vmatpush1.bf16.msra.mxu0 %v2013
    %2143 = vmatprep.subr.bf16.mxu0 %v2016
    %2144 = vmatpush1.bf16.msra.mxu0 %v2015
    %2145 = vmatprep.subr.bf16.mxu0 %v2018
    %2146 = vmatpush1.bf16.msra.mxu0 %v2017
    %2147 = vmatprep.subr.bf16.mxu0 %v2020
    %2148 = vmatpush1.bf16.msra.mxu0 %v2019
    %2149 = vmatprep.subr.bf16.mxu0 %v2022
    %2150 = vmatpush1.bf16.msra.mxu0 %v2021
    %2151 = vmatprep.subr.bf16.mxu0 %v2024
    %2152 = vmatpush1.bf16.msra.mxu0 %v2023
    %2153 = vmatprep.subr.bf16.mxu0 %v2026
    %2154 = vmatpush1.bf16.msra.mxu0 %v2025
    %2155 = vmatprep.subr.bf16.mxu0 %v2028
    %2156 = vmatpush1.bf16.msra.mxu0 %v2027
    %2157 = vmatprep.subr.bf16.mxu0 %v2030
    %2158 = vmatpush1.bf16.msra.mxu0 %v2029
    %2159 = vmatprep.subr.bf16.mxu0 %v2032
    %2160 = vmatpush1.bf16.msra.mxu0 %v2031
    %2161 = vmatprep.mubr.bf16.mxu0 %v1730
    %2162 = vmatmul.mubr.bf16.gmra.mrb[0].mxu0 %v1729
    %v2163 = vpop.f32.mrb[0].mxu0
    %v2164 = vadd.f32 %v1802, %v2163
    %v2165 = vpop.f32.mrb[0].mxu0
    %v2166 = vadd.f32 %v1806, %v2165
    %v2167 = vpop.f32.mrb[0].mxu0
    %v2168 = vadd.f32 %v1802, %v2167
    %v2169 = vpop.f32.mrb[0].mxu0
    %v2170 = vadd.f32 %v1806, %v2169
    %2171 = vdwg.mxu0
    %2172 = vmatprep.subr.bf16.mxu0 %v2034
    %2173 = vmatpush1.bf16.msra.mxu0 %v2033
    %2174 = vmatprep.subr.bf16.mxu0 %v2036
    %2175 = vmatpush1.bf16.msra.mxu0 %v2035
    %2176 = vmatprep.subr.bf16.mxu0 %v2038
    %2177 = vmatpush1.bf16.msra.mxu0 %v2037
    %2178 = vmatprep.subr.bf16.mxu0 %v2040
    %2179 = vmatpush1.bf16.msra.mxu0 %v2039
    %2180 = vmatprep.subr.bf16.mxu0 %v2042
    %2181 = vmatpush1.bf16.msra.mxu0 %v2041
    %2182 = vmatprep.subr.bf16.mxu0 %v2044
    %2183 = vmatpush1.bf16.msra.mxu0 %v2043
    %2184 = vmatprep.subr.bf16.mxu0 %v2046
    %2185 = vmatpush1.bf16.msra.mxu0 %v2045
    %2186 = vmatprep.subr.bf16.mxu0 %v2048
    %2187 = vmatpush1.bf16.msra.mxu0 %v2047
    %2188 = vmatprep.subr.bf16.mxu0 %v2050
    %2189 = vmatpush1.bf16.msra.mxu0 %v2049
    %2190 = vmatprep.subr.bf16.mxu0 %v2052
    %2191 = vmatpush1.bf16.msra.mxu0 %v2051
    %2192 = vmatprep.subr.bf16.mxu0 %v2054
    %2193 = vmatpush1.bf16.msra.mxu0 %v2053
    %2194 = vmatprep.subr.bf16.mxu0 %v2056
    %2195 = vmatpush1.bf16.msra.mxu0 %v2055
    %2196 = vmatprep.subr.bf16.mxu0 %v2058
    %2197 = vmatpush1.bf16.msra.mxu0 %v2057
    %2198 = vmatprep.subr.bf16.mxu0 %v2060
    %2199 = vmatpush1.bf16.msra.mxu0 %v2059
    %2200 = vmatprep.subr.bf16.mxu0 %v2062
    %2201 = vmatpush1.bf16.msra.mxu0 %v2061
    %2202 = vmatprep.subr.bf16.mxu0 %v2064
    %2203 = vmatpush1.bf16.msra.mxu0 %v2063
    %2204 = vmatprep.mubr.bf16.mxu0 %v1732
    %2205 = vmatmul.mubr.bf16.gmra.mrb[0].mxu0 %v1731
    %v2206 = vpop.f32.mrb[0].mxu0
    %v2207 = vadd.f32 %v2164, %v2206
    %v2208 = vpop.f32.mrb[0].mxu0
    %v2209 = vadd.f32 %v2166, %v2208
    %v2210 = vpop.f32.mrb[0].mxu0
    %v2211 = vadd.f32 %v2168, %v2210
    %v2212 = vpop.f32.mrb[0].mxu0
    %v2213 = vadd.f32 %v2170, %v2212
    %2214 = vdwg.mxu0
    %v2215 = vmul.f32 %v2207, 0.5
    %v2216 = vmul.f32 %v2209, 0.5
    %v2217 = vmul.f32 %v2211, 0.5
    %v2218 = vmul.f32 %v2213, 0.5
    %v2219 = vtanh.pop %v2215
    %v2220 = vtanh.pop %v2216
    %v2221 = vtanh.pop %v2217
    %v2222 = vtanh.pop %v2218
    %v2223 = vadd.f32 %v2219, 1.0
    %v2224 = vadd.f32 %v2220, 1.0
    %v2225 = vadd.f32 %v2221, 1.0
    %v2226 = vadd.f32 %v2222, 1.0
    %v2227 = vmul.f32 %v2223, 0.5
    %v2228 = vmul.f32 %v2224, 0.5
    %v2229 = vmul.f32 %v2225, 0.5
    %v2230 = vmul.f32 %v2226, 0.5
    %v2231 = vpack.c.bf16 %v2229, %v2227
    %v2232 = vpack.c.bf16 %v2230, %v2228
    %v2235 = vunpack.c.l.b16 %v2231
    %v2236 = vunpack.c.l.b16 %v2232
    %v2237 = vunpack.c.h.b16 %v2231
    %v2238 = vunpack.c.h.b16 %v2232
    %v2239 = vpack.c.b16 %v2236, %v2235
    %v2240 = vpack.c.b16 %v2238, %v2237
    %2243 = vst [vmem:[%s11] sm:$0xff] %v2239
    %2244 = vst [vmem:[%s11 + $0x8] sm:$0xff] %v2240
    // Predicated region
    $region58: #{vae_forward.1} parent=1 // pred_check
      _
    $region59: #{vae_forward.1} parent=1 // pred_check_branch
      %2246 = sbr.rel (0) target = $region61
    $region60: #{vae_forward.1} parent=1 // pred_region
      _
    $region61: #{vae_forward.1} parent=1 // pred_fallthru
      _
    // Predicated region
    $region62: #{vae_forward.1} parent=1 // pred_check
      _
    $region63: #{vae_forward.1} parent=1 // pred_check_branch
      %2248 = sbr.rel (0) target = $region65
    $region64: #{vae_forward.1} parent=1 // pred_region
      _
    $region65: #{vae_forward.1} parent=1 // pred_fallthru
      _
    // Predicated region
    $region66: #{vae_forward.1} parent=1 // pred_check
      _
    $region67: #{vae_forward.1} parent=1 // pred_check_branch
      %2250 = sbr.rel (0) target = $region69
    $region68: #{vae_forward.1} parent=1 // pred_region
      _
    $region69: #{vae_forward.1} parent=1 // pred_fallthru
      _
    // Predicated region
    $region70: #{vae_forward.1} parent=1 // pred_check
      _
    $region71: #{vae_forward.1} parent=1 // pred_check_branch
      %2252 = sbr.rel (0) target = $region73
    $region72: #{vae_forward.1} parent=1 // pred_region
      _
    $region73: #{vae_forward.1} parent=1 // pred_fallthru
      _
    %2253 = vsyncpa [#allocation5], 1
    %2254 = vsyncpa [#allocation7], 1
    %2255 = vsyncpa [#allocation10], 1

</llo_original>
